<compile_context>
chip_gen: v7x
topology: tpu7x:2x2x1
jax: 0.10.0
libtpu: 0.0.40
codegen_flags: <defaults>
</compile_context>

<pallas_src>
import math
import functools

import jax
import jax.numpy as jnp
from jax import lax
from jax.experimental import pallas as pl
from jax.experimental.pallas import tpu as pltpu


def mha_kernel(x_ref, wq_ref, wk_ref, wv_ref, wo_ref, bo_ref, o_ref, ctx_ref,
               *, num_heads, head_dim, batch, seq):
    """Fused multi-head attention over the whole (B, S) block.

    x_ref  : (B, S, d_in)        VMEM
    wq/wk/wv_ref : (d_in, d_out) VMEM
    wo_ref : (d_out, d_out)      VMEM
    bo_ref : (1, d_out)          VMEM
    o_ref  : (B, S, d_out)       VMEM
    ctx_ref: (B*S, d_out) f32    VMEM scratch (head-concat slab)
    """
    d_in = x_ref.shape[-1]
    d_out = num_heads * head_dim
    scale = 1.0 / math.sqrt(head_dim)

    # One fused QKV projection over every token in the batch (M = B*S rows).
    x2 = x_ref[...].reshape(batch * seq, d_in)
    # Fold the 1/sqrt(head_dim) scale into q (numerically equivalent, far fewer VPU ops
    # than scaling every (S, S) score matrix).
    q = jnp.dot(x2, wq_ref[...], preferred_element_type=jnp.float32) * scale
    k = jnp.dot(x2, wk_ref[...], preferred_element_type=jnp.float32)
    v = jnp.dot(x2, wv_ref[...], preferred_element_type=jnp.float32)

    # Per-(batch, head) attention.  B and H are tiny, static -> fully unrolled.
    for b in range(batch):
        r0 = b * seq
        for h in range(num_heads):
            c0 = h * head_dim
            qh = q[r0:r0 + seq, c0:c0 + head_dim]   # (S, hd)
            kh = k[r0:r0 + seq, c0:c0 + head_dim]   # (S, hd)
            vh = v[r0:r0 + seq, c0:c0 + head_dim]   # (S, hd)

            # q @ k^T expressed as dot_general contracting the last dim of BOTH operands:
            # the MXU consumes the RHS-transposed form natively, no XLU transpose emitted.
            scores = lax.dot_general(
                qh, kh, (((1,), (1,)), ((), ())),
                preferred_element_type=jnp.float32)          # (S, S)

            # NOTE: NO causal mask -- matches the non-inplace masked_fill in the PyTorch src.
            m = jnp.max(scores, axis=-1, keepdims=True)
            p = jnp.exp(scores - m)
            denom = jnp.sum(p, axis=-1, keepdims=True)
            attn = p * pl.reciprocal(denom, approx=False)     # stable softmax

            # Write this head's context directly into the slab (== transpose(1,2)+view
            # head concatenation) -- no jnp.concatenate copy, no long live ranges.
            ctx_ref[pl.ds(r0, seq), pl.ds(c0, head_dim)] = jnp.dot(
                attn, vh, preferred_element_type=jnp.float32)

    # Output projection with bias over the whole slab (contraction depth = d_out).
    out = jnp.dot(ctx_ref[...], wo_ref[...],
                  preferred_element_type=jnp.float32) + bo_ref[...]
    o_ref[...] = out.reshape(batch, seq, d_out).astype(o_ref.dtype)


def multi_head_attention(x, wq, wk, wv, wo, bo, *, num_heads):
    """x: (B, S, d_in); wq/wk/wv: (d_in, d_out); wo: (d_out, d_out); bo: (d_out,)."""
    B, S, d_in = x.shape
    d_out = wq.shape[1]
    head_dim = d_out // num_heads
    bo2 = bo.reshape(1, d_out)

    kernel = functools.partial(
        mha_kernel, num_heads=num_heads, head_dim=head_dim, batch=B, seq=S)

    # Tiny problem: single kernel invocation, no grid, whole operands resident in VMEM.
    return pl.pallas_call(
        kernel,
        out_shape=jax.ShapeDtypeStruct((B, S, d_out), x.dtype),
        scratch_shapes=[pltpu.VMEM((B * S, d_out), jnp.float32)],
    )(x, wq, wk, wv, wo, bo2)


def reference_mha(x, wq, wk, wv, wo, bo, *, num_heads):
    """Pure-JAX reference mirroring the PyTorch forward (no mask applied, eval dropout)."""
    B, S, d_in = x.shape
    d_out = wq.shape[1]
    hd = d_out // num_heads
    q = (x @ wq).reshape(B, S, num_heads, hd).transpose(0, 2, 1, 3)
    k = (x @ wk).reshape(B, S, num_heads, hd).transpose(0, 2, 1, 3)
    v = (x @ wv).reshape(B, S, num_heads, hd).transpose(0, 2, 1, 3)
    scores = jnp.einsum("bhqd,bhkd->bhqk", q, k) / math.sqrt(hd)
    attn = jax.nn.softmax(scores, axis=-1)
    ctx = jnp.einsum("bhqk,bhkd->bhqd", attn, v).transpose(0, 2, 1, 3).reshape(B, S, d_out)
    return ctx @ wo + bo


if __name__ == "__main__":
    # Module hyperparameters (small, consistent with the forward pass).
    B, S = 2, 8
    d_in, d_out = 32, 32
    num_heads = 4
    context_length = S
    dropout_p = 0.0  # eval semantics -> identity

    key = jax.random.PRNGKey(0)
    kx, kq, kk, kv, ko, kb = jax.random.split(key, 6)

    x = jax.random.normal(kx, (B, S, d_in), dtype=jnp.float32)

    # Deterministic parameter init (kept in (in, out) layout for x @ W).
    scale_in = 1.0 / math.sqrt(d_in)
    scale_out = 1.0 / math.sqrt(d_out)
    wq = jax.random.uniform(kq, (d_in, d_out), jnp.float32, -scale_in, scale_in)
    wk = jax.random.uniform(kk, (d_in, d_out), jnp.float32, -scale_in, scale_in)
    wv = jax.random.uniform(kv, (d_in, d_out), jnp.float32, -scale_in, scale_in)
    wo = jax.random.uniform(ko, (d_out, d_out), jnp.float32, -scale_out, scale_out)
    bo = jax.random.uniform(kb, (d_out,), jnp.float32, -scale_out, scale_out)

    out = multi_head_attention(x, wq, wk, wv, wo, bo, num_heads=num_heads)
    out = jax.block_until_ready(out)

    ref = reference_mha(x, wq, wk, wv, wo, bo, num_heads=num_heads)
    assert out.shape == (B, S, d_out)
    assert jnp.allclose(out, ref, atol=1e-4, rtol=1e-4), "mismatch vs JAX reference"

    print("KERNEL_OK")
</pallas_src>

<mosaic_0001>
module attributes {stable_mosaic.version = 11 : i64} {
  func.func @mha_kernel(%arg0: memref<2x8x32xf32, #tpu.memory_space<vmem>>, %arg1: memref<32x32xf32, #tpu.memory_space<vmem>>, %arg2: memref<32x32xf32, #tpu.memory_space<vmem>>, %arg3: memref<32x32xf32, #tpu.memory_space<vmem>>, %arg4: memref<32x32xf32, #tpu.memory_space<vmem>>, %arg5: memref<1x32xf32, #tpu.memory_space<vmem>>, %arg6: memref<2x8x32xf32, #tpu.memory_space<vmem>>, %arg7: memref<16x32xf32, #tpu.memory_space<vmem>>) attributes {dimension_semantics = [], scalar_prefetch = 0 : i64, scratch_operands = 1 : i64, tpu.core_type = #tpu.core_type<tc>} {
    %c0 = arith.constant 0 : index
    %c0_0 = arith.constant 0 : index
    %c0_1 = arith.constant 0 : index
    %0 = vector.load %arg0[%c0, %c0_0, %c0_1] : memref<2x8x32xf32, #tpu.memory_space<vmem>>, vector<2x8x32xf32>
    %1 = vector.shape_cast %0 : vector<2x8x32xf32> to vector<16x32xf32>
    %c0_2 = arith.constant 0 : index
    %c0_3 = arith.constant 0 : index
    %2 = vector.load %arg1[%c0_2, %c0_3] : memref<32x32xf32, #tpu.memory_space<vmem>>, vector<32x32xf32>
    %cst = arith.constant dense<0.000000e+00> : vector<16x32xf32>
    %3 = tpu.matmul %1, %2, %cst {dimension_numbers = #tpu.dot_dimension_numbers<[1], [0], [0], [1], [0, 0, 1, 1], [], []>} : vector<16x32xf32>, vector<32x32xf32>, vector<16x32xf32> -> vector<16x32xf32>
    %cst_4 = arith.constant 0.353553385 : f32
    %4 = vector.broadcast %cst_4 : f32 to vector<16x32xf32>
    %5 = arith.mulf %3, %4 : vector<16x32xf32>
    %c0_5 = arith.constant 0 : index
    %c0_6 = arith.constant 0 : index
    %6 = vector.load %arg2[%c0_5, %c0_6] : memref<32x32xf32, #tpu.memory_space<vmem>>, vector<32x32xf32>
    %cst_7 = arith.constant dense<0.000000e+00> : vector<16x32xf32>
    %7 = tpu.matmul %1, %6, %cst_7 {dimension_numbers = #tpu.dot_dimension_numbers<[1], [0], [0], [1], [0, 0, 1, 1], [], []>} : vector<16x32xf32>, vector<32x32xf32>, vector<16x32xf32> -> vector<16x32xf32>
    %c0_8 = arith.constant 0 : index
    %c0_9 = arith.constant 0 : index
    %8 = vector.load %arg3[%c0_8, %c0_9] : memref<32x32xf32, #tpu.memory_space<vmem>>, vector<32x32xf32>
    %cst_10 = arith.constant dense<0.000000e+00> : vector<16x32xf32>
    %9 = tpu.matmul %1, %8, %cst_10 {dimension_numbers = #tpu.dot_dimension_numbers<[1], [0], [0], [1], [0, 0, 1, 1], [], []>} : vector<16x32xf32>, vector<32x32xf32>, vector<16x32xf32> -> vector<16x32xf32>
    %10 = vector.extract_strided_slice %5 {offsets = [0, 0], sizes = [8, 8], strides = [1, 1]} : vector<16x32xf32> to vector<8x8xf32>
    %11 = vector.extract_strided_slice %7 {offsets = [0, 0], sizes = [8, 8], strides = [1, 1]} : vector<16x32xf32> to vector<8x8xf32>
    %12 = vector.extract_strided_slice %9 {offsets = [0, 0], sizes = [8, 8], strides = [1, 1]} : vector<16x32xf32> to vector<8x8xf32>
    %cst_11 = arith.constant dense<0.000000e+00> : vector<8x8xf32>
    %13 = tpu.matmul %10, %11, %cst_11 {dimension_numbers = #tpu.dot_dimension_numbers<[1], [1], [0], [0], [0, 0, 1, 0], [], []>} : vector<8x8xf32>, vector<8x8xf32>, vector<8x8xf32> -> vector<8x8xf32>
    %cst_12 = arith.constant dense<0xFF800000> : vector<8xf32>
    %14 = vector.multi_reduction <maximumf>, %13, %cst_12 [1] : vector<8x8xf32> to vector<8xf32>
    %15 = vector.shape_cast %14 : vector<8xf32> to vector<8x1xf32>
    %16 = vector.broadcast %15 : vector<8x1xf32> to vector<8x8xf32>
    %17 = arith.subf %13, %16 : vector<8x8xf32>
    %18 = math.exp %17 : vector<8x8xf32>
    %cst_13 = arith.constant dense<0.000000e+00> : vector<8xf32>
    %19 = vector.multi_reduction <add>, %18, %cst_13 [1] : vector<8x8xf32> to vector<8xf32>
    %20 = vector.shape_cast %19 : vector<8xf32> to vector<8x1xf32>
    %21 = tpu.reciprocal %20 : vector<8x1xf32> -> vector<8x1xf32>
    %22 = vector.broadcast %21 : vector<8x1xf32> to vector<8x8xf32>
    %23 = arith.mulf %18, %22 : vector<8x8xf32>
    %cst_14 = arith.constant dense<0.000000e+00> : vector<8x8xf32>
    %24 = tpu.matmul %23, %12, %cst_14 {dimension_numbers = #tpu.dot_dimension_numbers<[1], [0], [0], [1], [0, 0, 1, 1], [], []>} : vector<8x8xf32>, vector<8x8xf32>, vector<8x8xf32> -> vector<8x8xf32>
    %c0_15 = arith.constant 0 : index
    %c0_16 = arith.constant 0 : index
    %25 = vector.load %arg7[%c0_15, %c0_16] : memref<16x32xf32, #tpu.memory_space<vmem>>, vector<8x8xf32>
    tpu.vector_store %arg7[%c0_15, %c0_16], %24 {strides = array<i32>} : memref<16x32xf32, #tpu.memory_space<vmem>>, vector<8x8xf32>,
    %26 = vector.extract_strided_slice %5 {offsets = [0, 8], sizes = [8, 8], strides = [1, 1]} : vector<16x32xf32> to vector<8x8xf32>
    %27 = vector.extract_strided_slice %7 {offsets = [0, 8], sizes = [8, 8], strides = [1, 1]} : vector<16x32xf32> to vector<8x8xf32>
    %28 = vector.extract_strided_slice %9 {offsets = [0, 8], sizes = [8, 8], strides = [1, 1]} : vector<16x32xf32> to vector<8x8xf32>
    %cst_17 = arith.constant dense<0.000000e+00> : vector<8x8xf32>
    %29 = tpu.matmul %26, %27, %cst_17 {dimension_numbers = #tpu.dot_dimension_numbers<[1], [1], [0], [0], [0, 0, 1, 0], [], []>} : vector<8x8xf32>, vector<8x8xf32>, vector<8x8xf32> -> vector<8x8xf32>
    %cst_18 = arith.constant dense<0xFF800000> : vector<8xf32>
    %30 = vector.multi_reduction <maximumf>, %29, %cst_18 [1] : vector<8x8xf32> to vector<8xf32>
    %31 = vector.shape_cast %30 : vector<8xf32> to vector<8x1xf32>
    %32 = vector.broadcast %31 : vector<8x1xf32> to vector<8x8xf32>
    %33 = arith.subf %29, %32 : vector<8x8xf32>
    %34 = math.exp %33 : vector<8x8xf32>
    %cst_19 = arith.constant dense<0.000000e+00> : vector<8xf32>
    %35 = vector.multi_reduction <add>, %34, %cst_19 [1] : vector<8x8xf32> to vector<8xf32>
    %36 = vector.shape_cast %35 : vector<8xf32> to vector<8x1xf32>
    %37 = tpu.reciprocal %36 : vector<8x1xf32> -> vector<8x1xf32>
    %38 = vector.broadcast %37 : vector<8x1xf32> to vector<8x8xf32>
    %39 = arith.mulf %34, %38 : vector<8x8xf32>
    %cst_20 = arith.constant dense<0.000000e+00> : vector<8x8xf32>
    %40 = tpu.matmul %39, %28, %cst_20 {dimension_numbers = #tpu.dot_dimension_numbers<[1], [0], [0], [1], [0, 0, 1, 1], [], []>} : vector<8x8xf32>, vector<8x8xf32>, vector<8x8xf32> -> vector<8x8xf32>
    %c0_21 = arith.constant 0 : index
    %c8 = arith.constant 8 : index
    %41 = vector.load %arg7[%c0_21, %c8] : memref<16x32xf32, #tpu.memory_space<vmem>>, vector<8x8xf32>
    tpu.vector_store %arg7[%c0_21, %c8], %40 {strides = array<i32>} : memref<16x32xf32, #tpu.memory_space<vmem>>, vector<8x8xf32>,
    %42 = vector.extract_strided_slice %5 {offsets = [0, 16], sizes = [8, 8], strides = [1, 1]} : vector<16x32xf32> to vector<8x8xf32>
    %43 = vector.extract_strided_slice %7 {offsets = [0, 16], sizes = [8, 8], strides = [1, 1]} : vector<16x32xf32> to vector<8x8xf32>
    %44 = vector.extract_strided_slice %9 {offsets = [0, 16], sizes = [8, 8], strides = [1, 1]} : vector<16x32xf32> to vector<8x8xf32>
    %cst_22 = arith.constant dense<0.000000e+00> : vector<8x8xf32>
    %45 = tpu.matmul %42, %43, %cst_22 {dimension_numbers = #tpu.dot_dimension_numbers<[1], [1], [0], [0], [0, 0, 1, 0], [], []>} : vector<8x8xf32>, vector<8x8xf32>, vector<8x8xf32> -> vector<8x8xf32>
    %cst_23 = arith.constant dense<0xFF800000> : vector<8xf32>
    %46 = vector.multi_reduction <maximumf>, %45, %cst_23 [1] : vector<8x8xf32> to vector<8xf32>
    %47 = vector.shape_cast %46 : vector<8xf32> to vector<8x1xf32>
    %48 = vector.broadcast %47 : vector<8x1xf32> to vector<8x8xf32>
    %49 = arith.subf %45, %48 : vector<8x8xf32>
    %50 = math.exp %49 : vector<8x8xf32>
    %cst_24 = arith.constant dense<0.000000e+00> : vector<8xf32>
    %51 = vector.multi_reduction <add>, %50, %cst_24 [1] : vector<8x8xf32> to vector<8xf32>
    %52 = vector.shape_cast %51 : vector<8xf32> to vector<8x1xf32>
    %53 = tpu.reciprocal %52 : vector<8x1xf32> -> vector<8x1xf32>
    %54 = vector.broadcast %53 : vector<8x1xf32> to vector<8x8xf32>
    %55 = arith.mulf %50, %54 : vector<8x8xf32>
    %cst_25 = arith.constant dense<0.000000e+00> : vector<8x8xf32>
    %56 = tpu.matmul %55, %44, %cst_25 {dimension_numbers = #tpu.dot_dimension_numbers<[1], [0], [0], [1], [0, 0, 1, 1], [], []>} : vector<8x8xf32>, vector<8x8xf32>, vector<8x8xf32> -> vector<8x8xf32>
    %c0_26 = arith.constant 0 : index
    %c16 = arith.constant 16 : index
    %57 = vector.load %arg7[%c0_26, %c16] : memref<16x32xf32, #tpu.memory_space<vmem>>, vector<8x8xf32>
    tpu.vector_store %arg7[%c0_26, %c16], %56 {strides = array<i32>} : memref<16x32xf32, #tpu.memory_space<vmem>>, vector<8x8xf32>,
    %58 = vector.extract_strided_slice %5 {offsets = [0, 24], sizes = [8, 8], strides = [1, 1]} : vector<16x32xf32> to vector<8x8xf32>
    %59 = vector.extract_strided_slice %7 {offsets = [0, 24], sizes = [8, 8], strides = [1, 1]} : vector<16x32xf32> to vector<8x8xf32>
    %60 = vector.extract_strided_slice %9 {offsets = [0, 24], sizes = [8, 8], strides = [1, 1]} : vector<16x32xf32> to vector<8x8xf32>
    %cst_27 = arith.constant dense<0.000000e+00> : vector<8x8xf32>
    %61 = tpu.matmul %58, %59, %cst_27 {dimension_numbers = #tpu.dot_dimension_numbers<[1], [1], [0], [0], [0, 0, 1, 0], [], []>} : vector<8x8xf32>, vector<8x8xf32>, vector<8x8xf32> -> vector<8x8xf32>
    %cst_28 = arith.constant dense<0xFF800000> : vector<8xf32>
    %62 = vector.multi_reduction <maximumf>, %61, %cst_28 [1] : vector<8x8xf32> to vector<8xf32>
    %63 = vector.shape_cast %62 : vector<8xf32> to vector<8x1xf32>
    %64 = vector.broadcast %63 : vector<8x1xf32> to vector<8x8xf32>
    %65 = arith.subf %61, %64 : vector<8x8xf32>
    %66 = math.exp %65 : vector<8x8xf32>
    %cst_29 = arith.constant dense<0.000000e+00> : vector<8xf32>
    %67 = vector.multi_reduction <add>, %66, %cst_29 [1] : vector<8x8xf32> to vector<8xf32>
    %68 = vector.shape_cast %67 : vector<8xf32> to vector<8x1xf32>
    %69 = tpu.reciprocal %68 : vector<8x1xf32> -> vector<8x1xf32>
    %70 = vector.broadcast %69 : vector<8x1xf32> to vector<8x8xf32>
    %71 = arith.mulf %66, %70 : vector<8x8xf32>
    %cst_30 = arith.constant dense<0.000000e+00> : vector<8x8xf32>
    %72 = tpu.matmul %71, %60, %cst_30 {dimension_numbers = #tpu.dot_dimension_numbers<[1], [0], [0], [1], [0, 0, 1, 1], [], []>} : vector<8x8xf32>, vector<8x8xf32>, vector<8x8xf32> -> vector<8x8xf32>
    %c0_31 = arith.constant 0 : index
    %c24 = arith.constant 24 : index
    %73 = vector.load %arg7[%c0_31, %c24] : memref<16x32xf32, #tpu.memory_space<vmem>>, vector<8x8xf32>
    tpu.vector_store %arg7[%c0_31, %c24], %72 {strides = array<i32>} : memref<16x32xf32, #tpu.memory_space<vmem>>, vector<8x8xf32>,
    %74 = vector.extract_strided_slice %5 {offsets = [8, 0], sizes = [8, 8], strides = [1, 1]} : vector<16x32xf32> to vector<8x8xf32>
    %75 = vector.extract_strided_slice %7 {offsets = [8, 0], sizes = [8, 8], strides = [1, 1]} : vector<16x32xf32> to vector<8x8xf32>
    %76 = vector.extract_strided_slice %9 {offsets = [8, 0], sizes = [8, 8], strides = [1, 1]} : vector<16x32xf32> to vector<8x8xf32>
    %cst_32 = arith.constant dense<0.000000e+00> : vector<8x8xf32>
    %77 = tpu.matmul %74, %75, %cst_32 {dimension_numbers = #tpu.dot_dimension_numbers<[1], [1], [0], [0], [0, 0, 1, 0], [], []>} : vector<8x8xf32>, vector<8x8xf32>, vector<8x8xf32> -> vector<8x8xf32>
    %cst_33 = arith.constant dense<0xFF800000> : vector<8xf32>
    %78 = vector.multi_reduction <maximumf>, %77, %cst_33 [1] : vector<8x8xf32> to vector<8xf32>
    %79 = vector.shape_cast %78 : vector<8xf32> to vector<8x1xf32>
    %80 = vector.broadcast %79 : vector<8x1xf32> to vector<8x8xf32>
    %81 = arith.subf %77, %80 : vector<8x8xf32>
    %82 = math.exp %81 : vector<8x8xf32>
    %cst_34 = arith.constant dense<0.000000e+00> : vector<8xf32>
    %83 = vector.multi_reduction <add>, %82, %cst_34 [1] : vector<8x8xf32> to vector<8xf32>
    %84 = vector.shape_cast %83 : vector<8xf32> to vector<8x1xf32>
    %85 = tpu.reciprocal %84 : vector<8x1xf32> -> vector<8x1xf32>
    %86 = vector.broadcast %85 : vector<8x1xf32> to vector<8x8xf32>
    %87 = arith.mulf %82, %86 : vector<8x8xf32>
    %cst_35 = arith.constant dense<0.000000e+00> : vector<8x8xf32>
    %88 = tpu.matmul %87, %76, %cst_35 {dimension_numbers = #tpu.dot_dimension_numbers<[1], [0], [0], [1], [0, 0, 1, 1], [], []>} : vector<8x8xf32>, vector<8x8xf32>, vector<8x8xf32> -> vector<8x8xf32>
    %c8_36 = arith.constant 8 : index
    %c0_37 = arith.constant 0 : index
    %89 = vector.load %arg7[%c8_36, %c0_37] : memref<16x32xf32, #tpu.memory_space<vmem>>, vector<8x8xf32>
    tpu.vector_store %arg7[%c8_36, %c0_37], %88 {strides = array<i32>} : memref<16x32xf32, #tpu.memory_space<vmem>>, vector<8x8xf32>,
    %90 = vector.extract_strided_slice %5 {offsets = [8, 8], sizes = [8, 8], strides = [1, 1]} : vector<16x32xf32> to vector<8x8xf32>
    %91 = vector.extract_strided_slice %7 {offsets = [8, 8], sizes = [8, 8], strides = [1, 1]} : vector<16x32xf32> to vector<8x8xf32>
    %92 = vector.extract_strided_slice %9 {offsets = [8, 8], sizes = [8, 8], strides = [1, 1]} : vector<16x32xf32> to vector<8x8xf32>
    %cst_38 = arith.constant dense<0.000000e+00> : vector<8x8xf32>
    %93 = tpu.matmul %90, %91, %cst_38 {dimension_numbers = #tpu.dot_dimension_numbers<[1], [1], [0], [0], [0, 0, 1, 0], [], []>} : vector<8x8xf32>, vector<8x8xf32>, vector<8x8xf32> -> vector<8x8xf32>
    %cst_39 = arith.constant dense<0xFF800000> : vector<8xf32>
    %94 = vector.multi_reduction <maximumf>, %93, %cst_39 [1] : vector<8x8xf32> to vector<8xf32>
    %95 = vector.shape_cast %94 : vector<8xf32> to vector<8x1xf32>
    %96 = vector.broadcast %95 : vector<8x1xf32> to vector<8x8xf32>
    %97 = arith.subf %93, %96 : vector<8x8xf32>
    %98 = math.exp %97 : vector<8x8xf32>
    %cst_40 = arith.constant dense<0.000000e+00> : vector<8xf32>
    %99 = vector.multi_reduction <add>, %98, %cst_40 [1] : vector<8x8xf32> to vector<8xf32>
    %100 = vector.shape_cast %99 : vector<8xf32> to vector<8x1xf32>
    %101 = tpu.reciprocal %100 : vector<8x1xf32> -> vector<8x1xf32>
    %102 = vector.broadcast %101 : vector<8x1xf32> to vector<8x8xf32>
    %103 = arith.mulf %98, %102 : vector<8x8xf32>
    %cst_41 = arith.constant dense<0.000000e+00> : vector<8x8xf32>
    %104 = tpu.matmul %103, %92, %cst_41 {dimension_numbers = #tpu.dot_dimension_numbers<[1], [0], [0], [1], [0, 0, 1, 1], [], []>} : vector<8x8xf32>, vector<8x8xf32>, vector<8x8xf32> -> vector<8x8xf32>
    %c8_42 = arith.constant 8 : index
    %c8_43 = arith.constant 8 : index
    %105 = vector.load %arg7[%c8_42, %c8_43] : memref<16x32xf32, #tpu.memory_space<vmem>>, vector<8x8xf32>
    tpu.vector_store %arg7[%c8_42, %c8_43], %104 {strides = array<i32>} : memref<16x32xf32, #tpu.memory_space<vmem>>, vector<8x8xf32>,
    %106 = vector.extract_strided_slice %5 {offsets = [8, 16], sizes = [8, 8], strides = [1, 1]} : vector<16x32xf32> to vector<8x8xf32>
    %107 = vector.extract_strided_slice %7 {offsets = [8, 16], sizes = [8, 8], strides = [1, 1]} : vector<16x32xf32> to vector<8x8xf32>
    %108 = vector.extract_strided_slice %9 {offsets = [8, 16], sizes = [8, 8], strides = [1, 1]} : vector<16x32xf32> to vector<8x8xf32>
    %cst_44 = arith.constant dense<0.000000e+00> : vector<8x8xf32>
    %109 = tpu.matmul %106, %107, %cst_44 {dimension_numbers = #tpu.dot_dimension_numbers<[1], [1], [0], [0], [0, 0, 1, 0], [], []>} : vector<8x8xf32>, vector<8x8xf32>, vector<8x8xf32> -> vector<8x8xf32>
    %cst_45 = arith.constant dense<0xFF800000> : vector<8xf32>
    %110 = vector.multi_reduction <maximumf>, %109, %cst_45 [1] : vector<8x8xf32> to vector<8xf32>
    %111 = vector.shape_cast %110 : vector<8xf32> to vector<8x1xf32>
    %112 = vector.broadcast %111 : vector<8x1xf32> to vector<8x8xf32>
    %113 = arith.subf %109, %112 : vector<8x8xf32>
    %114 = math.exp %113 : vector<8x8xf32>
    %cst_46 = arith.constant dense<0.000000e+00> : vector<8xf32>
    %115 = vector.multi_reduction <add>, %114, %cst_46 [1] : vector<8x8xf32> to vector<8xf32>
    %116 = vector.shape_cast %115 : vector<8xf32> to vector<8x1xf32>
    %117 = tpu.reciprocal %116 : vector<8x1xf32> -> vector<8x1xf32>
    %118 = vector.broadcast %117 : vector<8x1xf32> to vector<8x8xf32>
    %119 = arith.mulf %114, %118 : vector<8x8xf32>
    %cst_47 = arith.constant dense<0.000000e+00> : vector<8x8xf32>
    %120 = tpu.matmul %119, %108, %cst_47 {dimension_numbers = #tpu.dot_dimension_numbers<[1], [0], [0], [1], [0, 0, 1, 1], [], []>} : vector<8x8xf32>, vector<8x8xf32>, vector<8x8xf32> -> vector<8x8xf32>
    %c8_48 = arith.constant 8 : index
    %c16_49 = arith.constant 16 : index
    %121 = vector.load %arg7[%c8_48, %c16_49] : memref<16x32xf32, #tpu.memory_space<vmem>>, vector<8x8xf32>
    tpu.vector_store %arg7[%c8_48, %c16_49], %120 {strides = array<i32>} : memref<16x32xf32, #tpu.memory_space<vmem>>, vector<8x8xf32>,
    %122 = vector.extract_strided_slice %5 {offsets = [8, 24], sizes = [8, 8], strides = [1, 1]} : vector<16x32xf32> to vector<8x8xf32>
    %123 = vector.extract_strided_slice %7 {offsets = [8, 24], sizes = [8, 8], strides = [1, 1]} : vector<16x32xf32> to vector<8x8xf32>
    %124 = vector.extract_strided_slice %9 {offsets = [8, 24], sizes = [8, 8], strides = [1, 1]} : vector<16x32xf32> to vector<8x8xf32>
    %cst_50 = arith.constant dense<0.000000e+00> : vector<8x8xf32>
    %125 = tpu.matmul %122, %123, %cst_50 {dimension_numbers = #tpu.dot_dimension_numbers<[1], [1], [0], [0], [0, 0, 1, 0], [], []>} : vector<8x8xf32>, vector<8x8xf32>, vector<8x8xf32> -> vector<8x8xf32>
    %cst_51 = arith.constant dense<0xFF800000> : vector<8xf32>
    %126 = vector.multi_reduction <maximumf>, %125, %cst_51 [1] : vector<8x8xf32> to vector<8xf32>
    %127 = vector.shape_cast %126 : vector<8xf32> to vector<8x1xf32>
    %128 = vector.broadcast %127 : vector<8x1xf32> to vector<8x8xf32>
    %129 = arith.subf %125, %128 : vector<8x8xf32>
    %130 = math.exp %129 : vector<8x8xf32>
    %cst_52 = arith.constant dense<0.000000e+00> : vector<8xf32>
    %131 = vector.multi_reduction <add>, %130, %cst_52 [1] : vector<8x8xf32> to vector<8xf32>
    %132 = vector.shape_cast %131 : vector<8xf32> to vector<8x1xf32>
    %133 = tpu.reciprocal %132 : vector<8x1xf32> -> vector<8x1xf32>
    %134 = vector.broadcast %133 : vector<8x1xf32> to vector<8x8xf32>
    %135 = arith.mulf %130, %134 : vector<8x8xf32>
    %cst_53 = arith.constant dense<0.000000e+00> : vector<8x8xf32>
    %136 = tpu.matmul %135, %124, %cst_53 {dimension_numbers = #tpu.dot_dimension_numbers<[1], [0], [0], [1], [0, 0, 1, 1], [], []>} : vector<8x8xf32>, vector<8x8xf32>, vector<8x8xf32> -> vector<8x8xf32>
    %c8_54 = arith.constant 8 : index
    %c24_55 = arith.constant 24 : index
    %137 = vector.load %arg7[%c8_54, %c24_55] : memref<16x32xf32, #tpu.memory_space<vmem>>, vector<8x8xf32>
    tpu.vector_store %arg7[%c8_54, %c24_55], %136 {strides = array<i32>} : memref<16x32xf32, #tpu.memory_space<vmem>>, vector<8x8xf32>,
    %c0_56 = arith.constant 0 : index
    %c0_57 = arith.constant 0 : index
    %138 = vector.load %arg7[%c0_56, %c0_57] : memref<16x32xf32, #tpu.memory_space<vmem>>, vector<16x32xf32>
    %c0_58 = arith.constant 0 : index
    %c0_59 = arith.constant 0 : index
    %139 = vector.load %arg4[%c0_58, %c0_59] : memref<32x32xf32, #tpu.memory_space<vmem>>, vector<32x32xf32>
    %cst_60 = arith.constant dense<0.000000e+00> : vector<16x32xf32>
    %140 = tpu.matmul %138, %139, %cst_60 {dimension_numbers = #tpu.dot_dimension_numbers<[1], [0], [0], [1], [0, 0, 1, 1], [], []>} : vector<16x32xf32>, vector<32x32xf32>, vector<16x32xf32> -> vector<16x32xf32>
    %c0_61 = arith.constant 0 : index
    %c0_62 = arith.constant 0 : index
    %141 = vector.load %arg5[%c0_61, %c0_62] : memref<1x32xf32, #tpu.memory_space<vmem>>, vector<1x32xf32>
    %142 = vector.broadcast %141 : vector<1x32xf32> to vector<16x32xf32>
    %143 = arith.addf %140, %142 : vector<16x32xf32>
    %144 = vector.shape_cast %143 : vector<16x32xf32> to vector<2x8x32xf32>
    %c0_63 = arith.constant 0 : index
    %c0_64 = arith.constant 0 : index
    %c0_65 = arith.constant 0 : index
    %145 = vector.load %arg6[%c0_63, %c0_64, %c0_65] : memref<2x8x32xf32, #tpu.memory_space<vmem>>, vector<2x8x32xf32>
    tpu.vector_store %arg6[%c0_63, %c0_64, %c0_65], %144 {strides = array<i32>} : memref<2x8x32xf32, #tpu.memory_space<vmem>>, vector<2x8x32xf32>,
    return
  }
}

</mosaic_0001>

<llo_original>
// kernel: tpu_custom_call.1
$region0: #{tpu_custom_call.1}
  #allocation0 [shape = 'u32[]', space=smem, size = 0x4, offset = 0x4, fixed_abs, tag = 'smem constant byte address 0x4 - core index']
  #allocation1 [shape = 'u32[144,128]{1,0:T(1,128)}', space=vmem, size = 0x12000, scoped, tag = 'internal scratch']
  #allocation2 [shape = 'f32[16,32]{1,0:T(8,128)}', space=vmem, size = 0x2000, scoped, tag = 'scratch operand']
  %s0 = inlined_call_operand.hbm [shape: f32[2,8,32], index: 0, kind: input, shape index: {}]
  %s1 = inlined_call_operand.hbm [shape: f32[32,32], index: 1, kind: input, shape index: {}]
  %s2 = inlined_call_operand.hbm [shape: f32[32,32], index: 2, kind: input, shape index: {}]
  %s3 = inlined_call_operand.hbm [shape: f32[32,32], index: 3, kind: input, shape index: {}]
  %s4 = inlined_call_operand.hbm [shape: f32[32,32], index: 4, kind: input, shape index: {}]
  %s5 = inlined_call_operand.vmem [shape: f32[1,32], index: 5, kind: input, shape index: {}]
  %s6 = inlined_call_operand.hbm [shape: f32[2,8,32], index: 6, kind: output, shape index: {}]
  %s7 = sld [smem:[#allocation0]]
  $region54: #{tpu_custom_call.1} parent=0
    _
  %s9 = ssub.s32 1, %s7
  %s10 = scalar_select 0, %s9, %s7
  $region1: #{tpu_custom_call.1} parent=0
    #allocation3 [shape = 'u8[8192]{0}', space=vmem, size = 0x2000, scoped, tag = 'input window, operand 0, single buffered']
    #allocation4 [shape = 's32[1]{0}', space=sflag, size = 0x4, scoped, tag = 'scoped memory for tpu_custom_call.1']
    #allocation5 [shape = 's32[1]{0}', space=sflag, size = 0x4, scoped, tag = 'scoped memory for tpu_custom_call.1']
    #allocation6 [shape = 'u8[16384]{0}', space=vmem, size = 0x4000, scoped, tag = 'input window, operand 1, single buffered']
    #allocation7 [shape = 's32[1]{0}', space=sflag, size = 0x4, scoped, tag = 'scoped memory for tpu_custom_call.1']
    #allocation8 [shape = 'u8[16384]{0}', space=vmem, size = 0x4000, scoped, tag = 'input window, operand 2, single buffered']
    #allocation9 [shape = 'u8[16384]{0}', space=vmem, size = 0x4000, scoped, tag = 'input window, operand 3, single buffered']
    #allocation10 [shape = 's32[1]{0}', space=sflag, size = 0x4, scoped, tag = 'scoped memory for tpu_custom_call.1']
    #allocation11 [shape = 'u8[16384]{0}', space=vmem, size = 0x4000, scoped, tag = 'input window, operand 4, single buffered']
    #allocation12 [shape = 'u8[8192]{0}', space=vmem, size = 0x2000, scoped, tag = 'output window, operand 0, single buffered']
    %11 = vsyncpa [#allocation4], 0
    %12 = vsyncpa [#allocation7], 0
    %13 = vsyncpa [#allocation10], 0
    %14 = vsyncpa [#allocation5], 0
    // Predicated region
    $region2: #{tpu_custom_call.1} parent=1 // pred_check
      _
    $region3: #{tpu_custom_call.1} parent=1 // pred_check_branch
      %16 = sbr.rel (0) target = $region5
    $region4: #{tpu_custom_call.1} parent=1 // pred_region
      %s18 = ssub.s32 256, 256
      %19 = vsyncadd [#allocation4], %s18
      %s20 = sshll.u32 [#allocation3], 4
      %s21 = int_to_ptr.vmem [resolvable:$true] %s20
      %26 = dma.hbm_to_vmem [thread:$0]  %s0, 256, %s21, [#allocation4], 128, 128, 8
    $region5: #{tpu_custom_call.1} parent=1 // pred_fallthru
      _
    // Predicated region
    $region6: #{tpu_custom_call.1} parent=1 // pred_check
      _
    $region7: #{tpu_custom_call.1} parent=1 // pred_check_branch
      %28 = sbr.rel (0) target = $region9
    $region8: #{tpu_custom_call.1} parent=1 // pred_region
      %s30 = ssub.s32 512, 512
      %31 = vsyncadd [#allocation7], %s30
      %s32 = sshll.u32 [#allocation6], 4
      %s33 = int_to_ptr.vmem [resolvable:$true] %s32
      %38 = dma.hbm_to_vmem [thread:$0]  %s1, 512, %s33, [#allocation7], 128, 128, 8
    $region9: #{tpu_custom_call.1} parent=1 // pred_fallthru
      _
    // Predicated region
    $region10: #{tpu_custom_call.1} parent=1 // pred_check
      _
    $region11: #{tpu_custom_call.1} parent=1 // pred_check_branch
      %40 = sbr.rel (0) target = $region13
    $region12: #{tpu_custom_call.1} parent=1 // pred_region
      %s42 = ssub.s32 512, 512
      %43 = vsyncadd [#allocation7], %s42
      %s44 = sshll.u32 [#allocation8], 4
      %s45 = int_to_ptr.vmem [resolvable:$true] %s44
      %50 = dma.hbm_to_vmem [thread:$0]  %s2, 512, %s45, [#allocation7], 128, 128, 8
    $region13: #{tpu_custom_call.1} parent=1 // pred_fallthru
      _
    // Predicated region
    $region14: #{tpu_custom_call.1} parent=1 // pred_check
      _
    $region15: #{tpu_custom_call.1} parent=1 // pred_check_branch
      %52 = sbr.rel (0) target = $region17
    $region16: #{tpu_custom_call.1} parent=1 // pred_region
      %s54 = ssub.s32 512, 512
      %55 = vsyncadd [#allocation10], %s54
      %s56 = sshll.u32 [#allocation9], 4
      %s57 = int_to_ptr.vmem [resolvable:$true] %s56
      %62 = dma.hbm_to_vmem [thread:$0]  %s3, 512, %s57, [#allocation10], 128, 128, 8
    $region17: #{tpu_custom_call.1} parent=1 // pred_fallthru
      _
    // Predicated region
    $region18: #{tpu_custom_call.1} parent=1 // pred_check
      _
    $region19: #{tpu_custom_call.1} parent=1 // pred_check_branch
      %64 = sbr.rel (0) target = $region21
    $region20: #{tpu_custom_call.1} parent=1 // pred_region
      %s66 = ssub.s32 512, 512
      %67 = vsyncadd [#allocation10], %s66
      %s68 = sshll.u32 [#allocation11], 4
      %s69 = int_to_ptr.vmem [resolvable:$true] %s68
      %74 = dma.hbm_to_vmem [thread:$0]  %s4, 512, %s69, [#allocation10], 128, 128, 8
    $region21: #{tpu_custom_call.1} parent=1 // pred_fallthru
      _
    // Predicated region
    $region22: #{tpu_custom_call.1} parent=1 // pred_check
      _
    $region23: #{tpu_custom_call.1} parent=1 // pred_check_branch
      %76 = sbr.rel (0) target = $region25
    $region24: #{tpu_custom_call.1} parent=1 // pred_region
      _
    $region25: #{tpu_custom_call.1} parent=1 // pred_fallthru
      _
    // Predicated region
    $region26: #{tpu_custom_call.1} parent=1 // pred_check
      _
    $region27: #{tpu_custom_call.1} parent=1 // pred_check_branch
      %78 = sbr.rel (0) target = $region29
    $region28: #{tpu_custom_call.1} parent=1 // pred_region
      %79 = dma.done [#allocation4], 256
    $region29: #{tpu_custom_call.1} parent=1 // pred_fallthru
      _
    // Predicated region
    $region30: #{tpu_custom_call.1} parent=1 // pred_check
      _
    $region31: #{tpu_custom_call.1} parent=1 // pred_check_branch
      %81 = sbr.rel (0) target = $region33
    $region32: #{tpu_custom_call.1} parent=1 // pred_region
      %82 = dma.done [#allocation7], 512
    $region33: #{tpu_custom_call.1} parent=1 // pred_fallthru
      _
    // Predicated region
    $region34: #{tpu_custom_call.1} parent=1 // pred_check
      _
    $region35: #{tpu_custom_call.1} parent=1 // pred_check_branch
      %84 = sbr.rel (0) target = $region37
    $region36: #{tpu_custom_call.1} parent=1 // pred_region
      %85 = dma.done [#allocation7], 512
    $region37: #{tpu_custom_call.1} parent=1 // pred_fallthru
      _
    // Predicated region
    $region38: #{tpu_custom_call.1} parent=1 // pred_check
      _
    $region39: #{tpu_custom_call.1} parent=1 // pred_check_branch
      %87 = sbr.rel (0) target = $region41
    $region40: #{tpu_custom_call.1} parent=1 // pred_region
      %88 = dma.done [#allocation10], 512
    $region41: #{tpu_custom_call.1} parent=1 // pred_fallthru
      _
    // Predicated region
    $region42: #{tpu_custom_call.1} parent=1 // pred_check
      _
    $region43: #{tpu_custom_call.1} parent=1 // pred_check_branch
      %90 = sbr.rel (0) target = $region45
    $region44: #{tpu_custom_call.1} parent=1 // pred_region
      %91 = dma.done [#allocation10], 512
    $region45: #{tpu_custom_call.1} parent=1 // pred_fallthru
      _
    %v92 = vld [vmem:[#allocation3] sm:$0xff]
    %v93 = vld [vmem:[#allocation3 + $0x8] sm:$0xff]
    %v94 = vld [vmem:[#allocation6] sm:$0xff]
    %v95 = vld [vmem:[#allocation6 + $0x8] sm:$0xff]
    %v96 = vld [vmem:[#allocation6 + $0x10] sm:$0xff]
    %v97 = vld [vmem:[#allocation6 + $0x18] sm:$0xff]
    %vm98 = vcmask 261120
    %v100 = vsel %vm98, %v92, 0
    %v103 = vsel %vm98, %v93, 0
    %105 = vmatprep.subr.mxu0 0.0
    %106 = vmatpush1.msra.mxu0 %v94
    %107 = vmatprep.subr.mxu0 0.0
    %108 = vmatpush1.msra.mxu0 %v95
    %109 = vmatprep.subr.mxu0 0.0
    %110 = vmatpush1.msra.mxu0 %v96
    %111 = vmatprep.subr.mxu0 0.0
    %112 = vmatpush1.msra.mxu0 %v97
    %113 = vmatprep.subr.mxu0 0.0
    %114 = vmatpush1.msra.mxu0 0.0
    %115 = vmatprep.subr.mxu0 0.0
    %116 = vmatpush1.msra.mxu0 0.0
    %117 = vmatprep.subr.mxu0 0.0
    %118 = vmatpush1.msra.mxu0 0.0
    %119 = vmatprep.subr.mxu0 0.0
    %120 = vmatpush1.msra.mxu0 0.0
    %121 = vmatprep.subr.mxu0 0.0
    %122 = vmatpush1.msra.mxu0 0.0
    %123 = vmatprep.subr.mxu0 0.0
    %124 = vmatpush1.msra.mxu0 0.0
    %125 = vmatprep.subr.mxu0 0.0
    %126 = vmatpush1.msra.mxu0 0.0
    %127 = vmatprep.subr.mxu0 0.0
    %128 = vmatpush1.msra.mxu0 0.0
    %129 = vmatprep.subr.mxu0 0.0
    %130 = vmatpush1.msra.mxu0 0.0
    %131 = vmatprep.subr.mxu0 0.0
    %132 = vmatpush1.msra.mxu0 0.0
    %133 = vmatprep.subr.mxu0 0.0
    %134 = vmatpush1.msra.mxu0 0.0
    %135 = vmatprep.subr.mxu0 0.0
    %136 = vmatpush1.msra.mxu0 0.0
    %137 = vmatprep.subr.mxu0 0.0
    %138 = vmatpush1.msra.mxu0 0.0
    %139 = vmatprep.subr.mxu0 0.0
    %140 = vmatpush1.msra.mxu0 0.0
    %141 = vmatprep.subr.mxu0 0.0
    %142 = vmatpush1.msra.mxu0 0.0
    %143 = vmatprep.subr.mxu0 0.0
    %144 = vmatpush1.msra.mxu0 0.0
    %145 = vmatprep.subr.mxu0 0.0
    %146 = vmatpush1.msra.mxu0 0.0
    %147 = vmatprep.subr.mxu0 0.0
    %148 = vmatpush1.msra.mxu0 0.0
    %149 = vmatprep.subr.mxu0 0.0
    %150 = vmatpush1.msra.mxu0 0.0
    %151 = vmatprep.subr.mxu0 0.0
    %152 = vmatpush1.msra.mxu0 0.0
    %153 = vmatprep.subr.mxu0 0.0
    %154 = vmatpush1.msra.mxu0 0.0
    %155 = vmatprep.subr.mxu0 0.0
    %156 = vmatpush1.msra.mxu0 0.0
    %157 = vmatprep.subr.mxu0 0.0
    %158 = vmatpush1.msra.mxu0 0.0
    %159 = vmatprep.subr.mxu0 0.0
    %160 = vmatpush1.msra.mxu0 0.0
    %161 = vmatprep.subr.mxu0 0.0
    %162 = vmatpush1.msra.mxu0 0.0
    %163 = vmatprep.subr.mxu0 0.0
    %164 = vmatpush1.msra.mxu0 0.0
    %165 = vmatprep.subr.mxu0 0.0
    %166 = vmatpush1.msra.mxu0 0.0
    %167 = vmatprep.subr.mxu0 0.0
    %168 = vmatpush1.msra.mxu0 0.0
    %169 = vmatprep.mubr.f32.mxu0 0.0
    %170 = vmatmul.mubr.f32.gmra.mrb[0].mxu0 %v100
    %v171 = vpop.f32.mrb[0].mxu0
    %v172 = vadd.f32 0.0, %v171
    %v173 = vpop.f32.mrb[0].mxu0
    %174 = vmatprep.mubr.f32.mxu0 0.0
    %175 = vmatmul.mubr.f32.gmra.mrb[0].mxu0 %v103
    %v176 = vpop.f32.mrb[0].mxu0
    %v177 = vadd.f32 0.0, %v176
    %v178 = vpop.f32.mrb[0].mxu0
    %179 = vdwg.mxu0
    %v180 = vmul.f32 %v172, 0.35355338
    %v181 = vmul.f32 %v177, 0.35355338
    %v182 = vld [vmem:[#allocation8] sm:$0xff]
    %v183 = vld [vmem:[#allocation8 + $0x8] sm:$0xff]
    %v184 = vld [vmem:[#allocation8 + $0x10] sm:$0xff]
    %v185 = vld [vmem:[#allocation8 + $0x18] sm:$0xff]
    %186 = vmatprep.subr.mxu0 0.0
    %187 = vmatpush1.msra.mxu0 %v182
    %188 = vmatprep.subr.mxu0 0.0
    %189 = vmatpush1.msra.mxu0 %v183
    %190 = vmatprep.subr.mxu0 0.0
    %191 = vmatpush1.msra.mxu0 %v184
    %192 = vmatprep.subr.mxu0 0.0
    %193 = vmatpush1.msra.mxu0 %v185
    %194 = vmatprep.subr.mxu0 0.0
    %195 = vmatpush1.msra.mxu0 0.0
    %196 = vmatprep.subr.mxu0 0.0
    %197 = vmatpush1.msra.mxu0 0.0
    %198 = vmatprep.subr.mxu0 0.0
    %199 = vmatpush1.msra.mxu0 0.0
    %200 = vmatprep.subr.mxu0 0.0
    %201 = vmatpush1.msra.mxu0 0.0
    %202 = vmatprep.subr.mxu0 0.0
    %203 = vmatpush1.msra.mxu0 0.0
    %204 = vmatprep.subr.mxu0 0.0
    %205 = vmatpush1.msra.mxu0 0.0
    %206 = vmatprep.subr.mxu0 0.0
    %207 = vmatpush1.msra.mxu0 0.0
    %208 = vmatprep.subr.mxu0 0.0
    %209 = vmatpush1.msra.mxu0 0.0
    %210 = vmatprep.subr.mxu0 0.0
    %211 = vmatpush1.msra.mxu0 0.0
    %212 = vmatprep.subr.mxu0 0.0
    %213 = vmatpush1.msra.mxu0 0.0
    %214 = vmatprep.subr.mxu0 0.0
    %215 = vmatpush1.msra.mxu0 0.0
    %216 = vmatprep.subr.mxu0 0.0
    %217 = vmatpush1.msra.mxu0 0.0
    %218 = vmatprep.subr.mxu0 0.0
    %219 = vmatpush1.msra.mxu0 0.0
    %220 = vmatprep.subr.mxu0 0.0
    %221 = vmatpush1.msra.mxu0 0.0
    %222 = vmatprep.subr.mxu0 0.0
    %223 = vmatpush1.msra.mxu0 0.0
    %224 = vmatprep.subr.mxu0 0.0
    %225 = vmatpush1.msra.mxu0 0.0
    %226 = vmatprep.subr.mxu0 0.0
    %227 = vmatpush1.msra.mxu0 0.0
    %228 = vmatprep.subr.mxu0 0.0
    %229 = vmatpush1.msra.mxu0 0.0
    %230 = vmatprep.subr.mxu0 0.0
    %231 = vmatpush1.msra.mxu0 0.0
    %232 = vmatprep.subr.mxu0 0.0
    %233 = vmatpush1.msra.mxu0 0.0
    %234 = vmatprep.subr.mxu0 0.0
    %235 = vmatpush1.msra.mxu0 0.0
    %236 = vmatprep.subr.mxu0 0.0
    %237 = vmatpush1.msra.mxu0 0.0
    %238 = vmatprep.subr.mxu0 0.0
    %239 = vmatpush1.msra.mxu0 0.0
    %240 = vmatprep.subr.mxu0 0.0
    %241 = vmatpush1.msra.mxu0 0.0
    %242 = vmatprep.subr.mxu0 0.0
    %243 = vmatpush1.msra.mxu0 0.0
    %244 = vmatprep.subr.mxu0 0.0
    %245 = vmatpush1.msra.mxu0 0.0
    %246 = vmatprep.subr.mxu0 0.0
    %247 = vmatpush1.msra.mxu0 0.0
    %248 = vmatprep.subr.mxu0 0.0
    %249 = vmatpush1.msra.mxu0 0.0
    %250 = vmatprep.mubr.f32.mxu0 0.0
    %251 = vmatmul.mubr.f32.gmra.mrb[0].mxu0 %v100
    %v252 = vpop.f32.mrb[0].mxu0
    %v253 = vadd.f32 0.0, %v252
    %v254 = vpop.f32.mrb[0].mxu0
    %255 = vmatprep.mubr.f32.mxu0 0.0
    %256 = vmatmul.mubr.f32.gmra.mrb[0].mxu0 %v103
    %v257 = vpop.f32.mrb[0].mxu0
    %v258 = vadd.f32 0.0, %v257
    %v259 = vpop.f32.mrb[0].mxu0
    %260 = vdwg.mxu0
    %v261 = vld [vmem:[#allocation9] sm:$0xff]
    %v262 = vld [vmem:[#allocation9 + $0x8] sm:$0xff]
    %v263 = vld [vmem:[#allocation9 + $0x10] sm:$0xff]
    %v264 = vld [vmem:[#allocation9 + $0x18] sm:$0xff]
    %265 = vmatprep.subr.mxu0 0.0
    %266 = vmatpush1.msra.mxu0 %v261
    %267 = vmatprep.subr.mxu0 0.0
    %268 = vmatpush1.msra.mxu0 %v262
    %269 = vmatprep.subr.mxu0 0.0
    %270 = vmatpush1.msra.mxu0 %v263
    %271 = vmatprep.subr.mxu0 0.0
    %272 = vmatpush1.msra.mxu0 %v264
    %273 = vmatprep.subr.mxu0 0.0
    %274 = vmatpush1.msra.mxu0 0.0
    %275 = vmatprep.subr.mxu0 0.0
    %276 = vmatpush1.msra.mxu0 0.0
    %277 = vmatprep.subr.mxu0 0.0
    %278 = vmatpush1.msra.mxu0 0.0
    %279 = vmatprep.subr.mxu0 0.0
    %280 = vmatpush1.msra.mxu0 0.0
    %281 = vmatprep.subr.mxu0 0.0
    %282 = vmatpush1.msra.mxu0 0.0
    %283 = vmatprep.subr.mxu0 0.0
    %284 = vmatpush1.msra.mxu0 0.0
    %285 = vmatprep.subr.mxu0 0.0
    %286 = vmatpush1.msra.mxu0 0.0
    %287 = vmatprep.subr.mxu0 0.0
    %288 = vmatpush1.msra.mxu0 0.0
    %289 = vmatprep.subr.mxu0 0.0
    %290 = vmatpush1.msra.mxu0 0.0
    %291 = vmatprep.subr.mxu0 0.0
    %292 = vmatpush1.msra.mxu0 0.0
    %293 = vmatprep.subr.mxu0 0.0
    %294 = vmatpush1.msra.mxu0 0.0
    %295 = vmatprep.subr.mxu0 0.0
    %296 = vmatpush1.msra.mxu0 0.0
    %297 = vmatprep.subr.mxu0 0.0
    %298 = vmatpush1.msra.mxu0 0.0
    %299 = vmatprep.subr.mxu0 0.0
    %300 = vmatpush1.msra.mxu0 0.0
    %301 = vmatprep.subr.mxu0 0.0
    %302 = vmatpush1.msra.mxu0 0.0
    %303 = vmatprep.subr.mxu0 0.0
    %304 = vmatpush1.msra.mxu0 0.0
    %305 = vmatprep.subr.mxu0 0.0
    %306 = vmatpush1.msra.mxu0 0.0
    %307 = vmatprep.subr.mxu0 0.0
    %308 = vmatpush1.msra.mxu0 0.0
    %309 = vmatprep.subr.mxu0 0.0
    %310 = vmatpush1.msra.mxu0 0.0
    %311 = vmatprep.subr.mxu0 0.0
    %312 = vmatpush1.msra.mxu0 0.0
    %313 = vmatprep.subr.mxu0 0.0
    %314 = vmatpush1.msra.mxu0 0.0
    %315 = vmatprep.subr.mxu0 0.0
    %316 = vmatpush1.msra.mxu0 0.0
    %317 = vmatprep.subr.mxu0 0.0
    %318 = vmatpush1.msra.mxu0 0.0
    %319 = vmatprep.subr.mxu0 0.0
    %320 = vmatpush1.msra.mxu0 0.0
    %321 = vmatprep.subr.mxu0 0.0
    %322 = vmatpush1.msra.mxu0 0.0
    %323 = vmatprep.subr.mxu0 0.0
    %324 = vmatpush1.msra.mxu0 0.0
    %325 = vmatprep.subr.mxu0 0.0
    %326 = vmatpush1.msra.mxu0 0.0
    %327 = vmatprep.subr.mxu0 0.0
    %328 = vmatpush1.msra.mxu0 0.0
    %329 = vmatprep.mubr.f32.mxu0 0.0
    %330 = vmatmul.mubr.f32.gmra.mrb[0].mxu0 %v100
    %v331 = vpop.f32.mrb[0].mxu0
    %v332 = vadd.f32 0.0, %v331
    %v333 = vpop.f32.mrb[0].mxu0
    %334 = vmatprep.mubr.f32.mxu0 0.0
    %335 = vmatmul.mubr.f32.gmra.mrb[0].mxu0 %v103
    %v336 = vpop.f32.mrb[0].mxu0
    %v337 = vadd.f32 0.0, %v336
    %v338 = vpop.f32.mrb[0].mxu0
    %339 = vdwg.mxu0
    %vm340 = vcmask 64512
    %v342 = vsel %vm340, %v180, 0
    %v345 = vsel %vm340, %v253, 0
    %347 = vmatprep.subr.mxu0 0.0
    %348 = vmatpush1.xpose.msra.mxu0 %v345
    %349 = vmatprep.subr.mxu0 0.0
    %350 = vmatpush1.xpose.msra.mxu0 0.0
    %351 = vmatprep.subr.mxu0 0.0
    %352 = vmatpush1.xpose.msra.mxu0 0.0
    %353 = vmatprep.subr.mxu0 0.0
    %354 = vmatpush1.xpose.msra.mxu0 0.0
    %355 = vmatprep.subr.mxu0 0.0
    %356 = vmatpush1.xpose.msra.mxu0 0.0
    %357 = vmatprep.subr.mxu0 0.0
    %358 = vmatpush1.xpose.msra.mxu0 0.0
    %359 = vmatprep.subr.mxu0 0.0
    %360 = vmatpush1.xpose.msra.mxu0 0.0
    %361 = vmatprep.subr.mxu0 0.0
    %362 = vmatpush1.xpose.msra.mxu0 0.0
    %363 = vmatprep.subr.mxu0 0.0
    %364 = vmatpush1.xpose.msra.mxu0 0.0
    %365 = vmatprep.subr.mxu0 0.0
    %366 = vmatpush1.xpose.msra.mxu0 0.0
    %367 = vmatprep.subr.mxu0 0.0
    %368 = vmatpush1.xpose.msra.mxu0 0.0
    %369 = vmatprep.subr.mxu0 0.0
    %370 = vmatpush1.xpose.msra.mxu0 0.0
    %371 = vmatprep.subr.mxu0 0.0
    %372 = vmatpush1.xpose.msra.mxu0 0.0
    %373 = vmatprep.subr.mxu0 0.0
    %374 = vmatpush1.xpose.msra.mxu0 0.0
    %375 = vmatprep.subr.mxu0 0.0
    %376 = vmatpush1.xpose.msra.mxu0 0.0
    %377 = vmatprep.subr.mxu0 0.0
    %378 = vmatpush1.xpose.msra.mxu0 0.0
    %379 = vmatprep.subr.mxu0 0.0
    %380 = vmatpush1.xpose.msra.mxu0 0.0
    %381 = vmatprep.subr.mxu0 0.0
    %382 = vmatpush1.xpose.msra.mxu0 0.0
    %383 = vmatprep.subr.mxu0 0.0
    %384 = vmatpush1.xpose.msra.mxu0 0.0
    %385 = vmatprep.subr.mxu0 0.0
    %386 = vmatpush1.xpose.msra.mxu0 0.0
    %387 = vmatprep.subr.mxu0 0.0
    %388 = vmatpush1.xpose.msra.mxu0 0.0
    %389 = vmatprep.subr.mxu0 0.0
    %390 = vmatpush1.xpose.msra.mxu0 0.0
    %391 = vmatprep.subr.mxu0 0.0
    %392 = vmatpush1.xpose.msra.mxu0 0.0
    %393 = vmatprep.subr.mxu0 0.0
    %394 = vmatpush1.xpose.msra.mxu0 0.0
    %395 = vmatprep.subr.mxu0 0.0
    %396 = vmatpush1.xpose.msra.mxu0 0.0
    %397 = vmatprep.subr.mxu0 0.0
    %398 = vmatpush1.xpose.msra.mxu0 0.0
    %399 = vmatprep.subr.mxu0 0.0
    %400 = vmatpush1.xpose.msra.mxu0 0.0
    %401 = vmatprep.subr.mxu0 0.0
    %402 = vmatpush1.xpose.msra.mxu0 0.0
    %403 = vmatprep.subr.mxu0 0.0
    %404 = vmatpush1.xpose.msra.mxu0 0.0
    %405 = vmatprep.subr.mxu0 0.0
    %406 = vmatpush1.xpose.msra.mxu0 0.0
    %407 = vmatprep.subr.mxu0 0.0
    %408 = vmatpush1.xpose.msra.mxu0 0.0
    %409 = vmatprep.subr.mxu0 0.0
    %410 = vmatpush1.xpose.msra.mxu0 0.0
    %411 = vmatprep.mubr.f32.mxu0 0.0
    %412 = vmatmul.mubr.f32.gmra.mrb[0].mxu0 %v342
    %v413 = vpop.f32.mrb[0].mxu0
    %v414 = vadd.f32 0.0, %v413
    %v415 = vpop.f32.mrb[0].mxu0
    %416 = vdwg.mxu0
    %v417 = vsel %vm340, %v414, -inf
    %418 = vmax.xlane.f32.xlu0 %v417
    %v419 = vpop.xlane.xlu0 %418
    %v420 = vsub.f32 %v414, %v419
    %v421 = vmul.f32 %v420, 1.442695
    %v422 = vpow.pop %v421
    %v423 = vsel %vm340, %v422, 0.0
    %424 = vadd.xlane.f32.xlu0 %v423
    %v425 = vpop.xlane.xlu0 %424
    %v426 = vrcp.pop %v425
    %v427 = vmul.f32 %v422, %v426
    %v429 = vsel %vm340, %v427, 0
    %431 = vmatprep.subr.mxu0 0.0
    %432 = vmatpush1.msra.mxu0 %v332
    %433 = vmatprep.subr.mxu0 0.0
    %434 = vmatpush1.msra.mxu0 0.0
    %435 = vmatprep.subr.mxu0 0.0
    %436 = vmatpush1.msra.mxu0 0.0
    %437 = vmatprep.subr.mxu0 0.0
    %438 = vmatpush1.msra.mxu0 0.0
    %439 = vmatprep.subr.mxu0 0.0
    %440 = vmatpush1.msra.mxu0 0.0
    %441 = vmatprep.subr.mxu0 0.0
    %442 = vmatpush1.msra.mxu0 0.0
    %443 = vmatprep.subr.mxu0 0.0
    %444 = vmatpush1.msra.mxu0 0.0
    %445 = vmatprep.subr.mxu0 0.0
    %446 = vmatpush1.msra.mxu0 0.0
    %447 = vmatprep.subr.mxu0 0.0
    %448 = vmatpush1.msra.mxu0 0.0
    %449 = vmatprep.subr.mxu0 0.0
    %450 = vmatpush1.msra.mxu0 0.0
    %451 = vmatprep.subr.mxu0 0.0
    %452 = vmatpush1.msra.mxu0 0.0
    %453 = vmatprep.subr.mxu0 0.0
    %454 = vmatpush1.msra.mxu0 0.0
    %455 = vmatprep.subr.mxu0 0.0
    %456 = vmatpush1.msra.mxu0 0.0
    %457 = vmatprep.subr.mxu0 0.0
    %458 = vmatpush1.msra.mxu0 0.0
    %459 = vmatprep.subr.mxu0 0.0
    %460 = vmatpush1.msra.mxu0 0.0
    %461 = vmatprep.subr.mxu0 0.0
    %462 = vmatpush1.msra.mxu0 0.0
    %463 = vmatprep.subr.mxu0 0.0
    %464 = vmatpush1.msra.mxu0 0.0
    %465 = vmatprep.subr.mxu0 0.0
    %466 = vmatpush1.msra.mxu0 0.0
    %467 = vmatprep.subr.mxu0 0.0
    %468 = vmatpush1.msra.mxu0 0.0
    %469 = vmatprep.subr.mxu0 0.0
    %470 = vmatpush1.msra.mxu0 0.0
    %471 = vmatprep.subr.mxu0 0.0
    %472 = vmatpush1.msra.mxu0 0.0
    %473 = vmatprep.subr.mxu0 0.0
    %474 = vmatpush1.msra.mxu0 0.0
    %475 = vmatprep.subr.mxu0 0.0
    %476 = vmatpush1.msra.mxu0 0.0
    %477 = vmatprep.subr.mxu0 0.0
    %478 = vmatpush1.msra.mxu0 0.0
    %479 = vmatprep.subr.mxu0 0.0
    %480 = vmatpush1.msra.mxu0 0.0
    %481 = vmatprep.subr.mxu0 0.0
    %482 = vmatpush1.msra.mxu0 0.0
    %483 = vmatprep.subr.mxu0 0.0
    %484 = vmatpush1.msra.mxu0 0.0
    %485 = vmatprep.subr.mxu0 0.0
    %486 = vmatpush1.msra.mxu0 0.0
    %487 = vmatprep.subr.mxu0 0.0
    %488 = vmatpush1.msra.mxu0 0.0
    %489 = vmatprep.subr.mxu0 0.0
    %490 = vmatpush1.msra.mxu0 0.0
    %491 = vmatprep.subr.mxu0 0.0
    %492 = vmatpush1.msra.mxu0 0.0
    %493 = vmatprep.subr.mxu0 0.0
    %494 = vmatpush1.msra.mxu0 0.0
    %495 = vmatprep.mubr.f32.mxu0 0.0
    %496 = vmatmul.mubr.f32.gmra.mrb[0].mxu0 %v429
    %v497 = vpop.f32.mrb[0].mxu0
    %v498 = vadd.f32 0.0, %v497
    %v499 = vpop.f32.mrb[0].mxu0
    %500 = vdwg.mxu0
    %501 = vst.msk [vmem:[#allocation2] sm:$0xff] %vm340, %v498
    %502 = vrot.lane.b32.xlu0 %v180, 120
    %v503 = vpop.permute.xlu0 %502
    %504 = vrot.lane.b32.xlu0 %v253, 120
    %v505 = vpop.permute.xlu0 %504
    %v506 = vsel %vm340, %v503, 0
    %v508 = vsel %vm340, %v505, 0
    %510 = vmatprep.subr.mxu0 0.0
    %511 = vmatpush1.xpose.msra.mxu0 %v508
    %512 = vmatprep.subr.mxu0 0.0
    %513 = vmatpush1.xpose.msra.mxu0 0.0
    %514 = vmatprep.subr.mxu0 0.0
    %515 = vmatpush1.xpose.msra.mxu0 0.0
    %516 = vmatprep.subr.mxu0 0.0
    %517 = vmatpush1.xpose.msra.mxu0 0.0
    %518 = vmatprep.subr.mxu0 0.0
    %519 = vmatpush1.xpose.msra.mxu0 0.0
    %520 = vmatprep.subr.mxu0 0.0
    %521 = vmatpush1.xpose.msra.mxu0 0.0
    %522 = vmatprep.subr.mxu0 0.0
    %523 = vmatpush1.xpose.msra.mxu0 0.0
    %524 = vmatprep.subr.mxu0 0.0
    %525 = vmatpush1.xpose.msra.mxu0 0.0
    %526 = vmatprep.subr.mxu0 0.0
    %527 = vmatpush1.xpose.msra.mxu0 0.0
    %528 = vmatprep.subr.mxu0 0.0
    %529 = vmatpush1.xpose.msra.mxu0 0.0
    %530 = vmatprep.subr.mxu0 0.0
    %531 = vmatpush1.xpose.msra.mxu0 0.0
    %532 = vmatprep.subr.mxu0 0.0
    %533 = vmatpush1.xpose.msra.mxu0 0.0
    %534 = vmatprep.subr.mxu0 0.0
    %535 = vmatpush1.xpose.msra.mxu0 0.0
    %536 = vmatprep.subr.mxu0 0.0
    %537 = vmatpush1.xpose.msra.mxu0 0.0
    %538 = vmatprep.subr.mxu0 0.0
    %539 = vmatpush1.xpose.msra.mxu0 0.0
    %540 = vmatprep.subr.mxu0 0.0
    %541 = vmatpush1.xpose.msra.mxu0 0.0
    %542 = vmatprep.subr.mxu0 0.0
    %543 = vmatpush1.xpose.msra.mxu0 0.0
    %544 = vmatprep.subr.mxu0 0.0
    %545 = vmatpush1.xpose.msra.mxu0 0.0
    %546 = vmatprep.subr.mxu0 0.0
    %547 = vmatpush1.xpose.msra.mxu0 0.0
    %548 = vmatprep.subr.mxu0 0.0
    %549 = vmatpush1.xpose.msra.mxu0 0.0
    %550 = vmatprep.subr.mxu0 0.0
    %551 = vmatpush1.xpose.msra.mxu0 0.0
    %552 = vmatprep.subr.mxu0 0.0
    %553 = vmatpush1.xpose.msra.mxu0 0.0
    %554 = vmatprep.subr.mxu0 0.0
    %555 = vmatpush1.xpose.msra.mxu0 0.0
    %556 = vmatprep.subr.mxu0 0.0
    %557 = vmatpush1.xpose.msra.mxu0 0.0
    %558 = vmatprep.subr.mxu0 0.0
    %559 = vmatpush1.xpose.msra.mxu0 0.0
    %560 = vmatprep.subr.mxu0 0.0
    %561 = vmatpush1.xpose.msra.mxu0 0.0
    %562 = vmatprep.subr.mxu0 0.0
    %563 = vmatpush1.xpose.msra.mxu0 0.0
    %564 = vmatprep.subr.mxu0 0.0
    %565 = vmatpush1.xpose.msra.mxu0 0.0
    %566 = vmatprep.subr.mxu0 0.0
    %567 = vmatpush1.xpose.msra.mxu0 0.0
    %568 = vmatprep.subr.mxu0 0.0
    %569 = vmatpush1.xpose.msra.mxu0 0.0
    %570 = vmatprep.subr.mxu0 0.0
    %571 = vmatpush1.xpose.msra.mxu0 0.0
    %572 = vmatprep.subr.mxu0 0.0
    %573 = vmatpush1.xpose.msra.mxu0 0.0
    %574 = vmatprep.mubr.f32.mxu0 0.0
    %575 = vmatmul.mubr.f32.gmra.mrb[0].mxu0 %v506
    %v576 = vpop.f32.mrb[0].mxu0
    %v577 = vadd.f32 0.0, %v576
    %v578 = vpop.f32.mrb[0].mxu0
    %579 = vdwg.mxu0
    %v580 = vsel %vm340, %v577, -inf
    %581 = vmax.xlane.f32.xlu0 %v580
    %v582 = vpop.xlane.xlu0 %581
    %v583 = vsub.f32 %v577, %v582
    %v584 = vmul.f32 %v583, 1.442695
    %v585 = vpow.pop %v584
    %v586 = vsel %vm340, %v585, 0.0
    %587 = vadd.xlane.f32.xlu0 %v586
    %v588 = vpop.xlane.xlu0 %587
    %v589 = vrcp.pop %v588
    %v590 = vmul.f32 %v585, %v589
    %592 = vrot.lane.b32.xlu0 %v332, 120
    %v593 = vpop.permute.xlu0 %592
    %v596 = vsel %vm340, %v590, 0
    %598 = vmatprep.subr.mxu0 0.0
    %599 = vmatpush1.msra.mxu0 %v593
    %600 = vmatprep.subr.mxu0 0.0
    %601 = vmatpush1.msra.mxu0 0.0
    %602 = vmatprep.subr.mxu0 0.0
    %603 = vmatpush1.msra.mxu0 0.0
    %604 = vmatprep.subr.mxu0 0.0
    %605 = vmatpush1.msra.mxu0 0.0
    %606 = vmatprep.subr.mxu0 0.0
    %607 = vmatpush1.msra.mxu0 0.0
    %608 = vmatprep.subr.mxu0 0.0
    %609 = vmatpush1.msra.mxu0 0.0
    %610 = vmatprep.subr.mxu0 0.0
    %611 = vmatpush1.msra.mxu0 0.0
    %612 = vmatprep.subr.mxu0 0.0
    %613 = vmatpush1.msra.mxu0 0.0
    %614 = vmatprep.subr.mxu0 0.0
    %615 = vmatpush1.msra.mxu0 0.0
    %616 = vmatprep.subr.mxu0 0.0
    %617 = vmatpush1.msra.mxu0 0.0
    %618 = vmatprep.subr.mxu0 0.0
    %619 = vmatpush1.msra.mxu0 0.0
    %620 = vmatprep.subr.mxu0 0.0
    %621 = vmatpush1.msra.mxu0 0.0
    %622 = vmatprep.subr.mxu0 0.0
    %623 = vmatpush1.msra.mxu0 0.0
    %624 = vmatprep.subr.mxu0 0.0
    %625 = vmatpush1.msra.mxu0 0.0
    %626 = vmatprep.subr.mxu0 0.0
    %627 = vmatpush1.msra.mxu0 0.0
    %628 = vmatprep.subr.mxu0 0.0
    %629 = vmatpush1.msra.mxu0 0.0
    %630 = vmatprep.subr.mxu0 0.0
    %631 = vmatpush1.msra.mxu0 0.0
    %632 = vmatprep.subr.mxu0 0.0
    %633 = vmatpush1.msra.mxu0 0.0
    %634 = vmatprep.subr.mxu0 0.0
    %635 = vmatpush1.msra.mxu0 0.0
    %636 = vmatprep.subr.mxu0 0.0
    %637 = vmatpush1.msra.mxu0 0.0
    %638 = vmatprep.subr.mxu0 0.0
    %639 = vmatpush1.msra.mxu0 0.0
    %640 = vmatprep.subr.mxu0 0.0
    %641 = vmatpush1.msra.mxu0 0.0
    %642 = vmatprep.subr.mxu0 0.0
    %643 = vmatpush1.msra.mxu0 0.0
    %644 = vmatprep.subr.mxu0 0.0
    %645 = vmatpush1.msra.mxu0 0.0
    %646 = vmatprep.subr.mxu0 0.0
    %647 = vmatpush1.msra.mxu0 0.0
    %648 = vmatprep.subr.mxu0 0.0
    %649 = vmatpush1.msra.mxu0 0.0
    %650 = vmatprep.subr.mxu0 0.0
    %651 = vmatpush1.msra.mxu0 0.0
    %652 = vmatprep.subr.mxu0 0.0
    %653 = vmatpush1.msra.mxu0 0.0
    %654 = vmatprep.subr.mxu0 0.0
    %655 = vmatpush1.msra.mxu0 0.0
    %656 = vmatprep.subr.mxu0 0.0
    %657 = vmatpush1.msra.mxu0 0.0
    %658 = vmatprep.subr.mxu0 0.0
    %659 = vmatpush1.msra.mxu0 0.0
    %660 = vmatprep.subr.mxu0 0.0
    %661 = vmatpush1.msra.mxu0 0.0
    %662 = vmatprep.mubr.f32.mxu0 0.0
    %663 = vmatmul.mubr.f32.gmra.mrb[0].mxu0 %v596
    %v664 = vpop.f32.mrb[0].mxu0
    %v665 = vadd.f32 0.0, %v664
    %v666 = vpop.f32.mrb[0].mxu0
    %667 = vdwg.mxu0
    %669 = vrot.lane.b32.xlu0 %v665, 8
    %v670 = vpop.permute.xlu0 %669
    %vm672 = vcmask 130112
    %673 = vst.msk [vmem:[#allocation2] sm:$0xff] %vm672, %v670
    %674 = vrot.lane.b32.xlu0 %v180, 112
    %v675 = vpop.permute.xlu0 %674
    %676 = vrot.lane.b32.xlu0 %v253, 112
    %v677 = vpop.permute.xlu0 %676
    %v678 = vsel %vm340, %v675, 0
    %v680 = vsel %vm340, %v677, 0
    %682 = vmatprep.subr.mxu0 0.0
    %683 = vmatpush1.xpose.msra.mxu0 %v680
    %684 = vmatprep.subr.mxu0 0.0
    %685 = vmatpush1.xpose.msra.mxu0 0.0
    %686 = vmatprep.subr.mxu0 0.0
    %687 = vmatpush1.xpose.msra.mxu0 0.0
    %688 = vmatprep.subr.mxu0 0.0
    %689 = vmatpush1.xpose.msra.mxu0 0.0
    %690 = vmatprep.subr.mxu0 0.0
    %691 = vmatpush1.xpose.msra.mxu0 0.0
    %692 = vmatprep.subr.mxu0 0.0
    %693 = vmatpush1.xpose.msra.mxu0 0.0
    %694 = vmatprep.subr.mxu0 0.0
    %695 = vmatpush1.xpose.msra.mxu0 0.0
    %696 = vmatprep.subr.mxu0 0.0
    %697 = vmatpush1.xpose.msra.mxu0 0.0
    %698 = vmatprep.subr.mxu0 0.0
    %699 = vmatpush1.xpose.msra.mxu0 0.0
    %700 = vmatprep.subr.mxu0 0.0
    %701 = vmatpush1.xpose.msra.mxu0 0.0
    %702 = vmatprep.subr.mxu0 0.0
    %703 = vmatpush1.xpose.msra.mxu0 0.0
    %704 = vmatprep.subr.mxu0 0.0
    %705 = vmatpush1.xpose.msra.mxu0 0.0
    %706 = vmatprep.subr.mxu0 0.0
    %707 = vmatpush1.xpose.msra.mxu0 0.0
    %708 = vmatprep.subr.mxu0 0.0
    %709 = vmatpush1.xpose.msra.mxu0 0.0
    %710 = vmatprep.subr.mxu0 0.0
    %711 = vmatpush1.xpose.msra.mxu0 0.0
    %712 = vmatprep.subr.mxu0 0.0
    %713 = vmatpush1.xpose.msra.mxu0 0.0
    %714 = vmatprep.subr.mxu0 0.0
    %715 = vmatpush1.xpose.msra.mxu0 0.0
    %716 = vmatprep.subr.mxu0 0.0
    %717 = vmatpush1.xpose.msra.mxu0 0.0
    %718 = vmatprep.subr.mxu0 0.0
    %719 = vmatpush1.xpose.msra.mxu0 0.0
    %720 = vmatprep.subr.mxu0 0.0
    %721 = vmatpush1.xpose.msra.mxu0 0.0
    %722 = vmatprep.subr.mxu0 0.0
    %723 = vmatpush1.xpose.msra.mxu0 0.0
    %724 = vmatprep.subr.mxu0 0.0
    %725 = vmatpush1.xpose.msra.mxu0 0.0
    %726 = vmatprep.subr.mxu0 0.0
    %727 = vmatpush1.xpose.msra.mxu0 0.0
    %728 = vmatprep.subr.mxu0 0.0
    %729 = vmatpush1.xpose.msra.mxu0 0.0
    %730 = vmatprep.subr.mxu0 0.0
    %731 = vmatpush1.xpose.msra.mxu0 0.0
    %732 = vmatprep.subr.mxu0 0.0
    %733 = vmatpush1.xpose.msra.mxu0 0.0
    %734 = vmatprep.subr.mxu0 0.0
    %735 = vmatpush1.xpose.msra.mxu0 0.0
    %736 = vmatprep.subr.mxu0 0.0
    %737 = vmatpush1.xpose.msra.mxu0 0.0
    %738 = vmatprep.subr.mxu0 0.0
    %739 = vmatpush1.xpose.msra.mxu0 0.0
    %740 = vmatprep.subr.mxu0 0.0
    %741 = vmatpush1.xpose.msra.mxu0 0.0
    %742 = vmatprep.subr.mxu0 0.0
    %743 = vmatpush1.xpose.msra.mxu0 0.0
    %744 = vmatprep.subr.mxu0 0.0
    %745 = vmatpush1.xpose.msra.mxu0 0.0
    %746 = vmatprep.mubr.f32.mxu0 0.0
    %747 = vmatmul.mubr.f32.gmra.mrb[0].mxu0 %v678
    %v748 = vpop.f32.mrb[0].mxu0
    %v749 = vadd.f32 0.0, %v748
    %v750 = vpop.f32.mrb[0].mxu0
    %751 = vdwg.mxu0
    %v752 = vsel %vm340, %v749, -inf
    %753 = vmax.xlane.f32.xlu0 %v752
    %v754 = vpop.xlane.xlu0 %753
    %v755 = vsub.f32 %v749, %v754
    %v756 = vmul.f32 %v755, 1.442695
    %v757 = vpow.pop %v756
    %v758 = vsel %vm340, %v757, 0.0
    %759 = vadd.xlane.f32.xlu0 %v758
    %v760 = vpop.xlane.xlu0 %759
    %v761 = vrcp.pop %v760
    %v762 = vmul.f32 %v757, %v761
    %763 = vrot.lane.b32.xlu0 %v332, 112
    %v764 = vpop.permute.xlu0 %763
    %v767 = vsel %vm340, %v762, 0
    %769 = vmatprep.subr.mxu0 0.0
    %770 = vmatpush1.msra.mxu0 %v764
    %771 = vmatprep.subr.mxu0 0.0
    %772 = vmatpush1.msra.mxu0 0.0
    %773 = vmatprep.subr.mxu0 0.0
    %774 = vmatpush1.msra.mxu0 0.0
    %775 = vmatprep.subr.mxu0 0.0
    %776 = vmatpush1.msra.mxu0 0.0
    %777 = vmatprep.subr.mxu0 0.0
    %778 = vmatpush1.msra.mxu0 0.0
    %779 = vmatprep.subr.mxu0 0.0
    %780 = vmatpush1.msra.mxu0 0.0
    %781 = vmatprep.subr.mxu0 0.0
    %782 = vmatpush1.msra.mxu0 0.0
    %783 = vmatprep.subr.mxu0 0.0
    %784 = vmatpush1.msra.mxu0 0.0
    %785 = vmatprep.subr.mxu0 0.0
    %786 = vmatpush1.msra.mxu0 0.0
    %787 = vmatprep.subr.mxu0 0.0
    %788 = vmatpush1.msra.mxu0 0.0
    %789 = vmatprep.subr.mxu0 0.0
    %790 = vmatpush1.msra.mxu0 0.0
    %791 = vmatprep.subr.mxu0 0.0
    %792 = vmatpush1.msra.mxu0 0.0
    %793 = vmatprep.subr.mxu0 0.0
    %794 = vmatpush1.msra.mxu0 0.0
    %795 = vmatprep.subr.mxu0 0.0
    %796 = vmatpush1.msra.mxu0 0.0
    %797 = vmatprep.subr.mxu0 0.0
    %798 = vmatpush1.msra.mxu0 0.0
    %799 = vmatprep.subr.mxu0 0.0
    %800 = vmatpush1.msra.mxu0 0.0
    %801 = vmatprep.subr.mxu0 0.0
    %802 = vmatpush1.msra.mxu0 0.0
    %803 = vmatprep.subr.mxu0 0.0
    %804 = vmatpush1.msra.mxu0 0.0
    %805 = vmatprep.subr.mxu0 0.0
    %806 = vmatpush1.msra.mxu0 0.0
    %807 = vmatprep.subr.mxu0 0.0
    %808 = vmatpush1.msra.mxu0 0.0
    %809 = vmatprep.subr.mxu0 0.0
    %810 = vmatpush1.msra.mxu0 0.0
    %811 = vmatprep.subr.mxu0 0.0
    %812 = vmatpush1.msra.mxu0 0.0
    %813 = vmatprep.subr.mxu0 0.0
    %814 = vmatpush1.msra.mxu0 0.0
    %815 = vmatprep.subr.mxu0 0.0
    %816 = vmatpush1.msra.mxu0 0.0
    %817 = vmatprep.subr.mxu0 0.0
    %818 = vmatpush1.msra.mxu0 0.0
    %819 = vmatprep.subr.mxu0 0.0
    %820 = vmatpush1.msra.mxu0 0.0
    %821 = vmatprep.subr.mxu0 0.0
    %822 = vmatpush1.msra.mxu0 0.0
    %823 = vmatprep.subr.mxu0 0.0
    %824 = vmatpush1.msra.mxu0 0.0
    %825 = vmatprep.subr.mxu0 0.0
    %826 = vmatpush1.msra.mxu0 0.0
    %827 = vmatprep.subr.mxu0 0.0
    %828 = vmatpush1.msra.mxu0 0.0
    %829 = vmatprep.subr.mxu0 0.0
    %830 = vmatpush1.msra.mxu0 0.0
    %831 = vmatprep.subr.mxu0 0.0
    %832 = vmatpush1.msra.mxu0 0.0
    %833 = vmatprep.mubr.f32.mxu0 0.0
    %834 = vmatmul.mubr.f32.gmra.mrb[0].mxu0 %v767
    %v835 = vpop.f32.mrb[0].mxu0
    %v836 = vadd.f32 0.0, %v835
    %v837 = vpop.f32.mrb[0].mxu0
    %838 = vdwg.mxu0
    %840 = vrot.lane.b32.xlu0 %v836, 16
    %v841 = vpop.permute.xlu0 %840
    %vm843 = vcmask 195712
    %844 = vst.msk [vmem:[#allocation2] sm:$0xff] %vm843, %v841
    %845 = vrot.lane.b32.xlu0 %v180, 104
    %v846 = vpop.permute.xlu0 %845
    %847 = vrot.lane.b32.xlu0 %v253, 104
    %v848 = vpop.permute.xlu0 %847
    %v849 = vsel %vm340, %v846, 0
    %v851 = vsel %vm340, %v848, 0
    %853 = vmatprep.subr.mxu0 0.0
    %854 = vmatpush1.xpose.msra.mxu0 %v851
    %855 = vmatprep.subr.mxu0 0.0
    %856 = vmatpush1.xpose.msra.mxu0 0.0
    %857 = vmatprep.subr.mxu0 0.0
    %858 = vmatpush1.xpose.msra.mxu0 0.0
    %859 = vmatprep.subr.mxu0 0.0
    %860 = vmatpush1.xpose.msra.mxu0 0.0
    %861 = vmatprep.subr.mxu0 0.0
    %862 = vmatpush1.xpose.msra.mxu0 0.0
    %863 = vmatprep.subr.mxu0 0.0
    %864 = vmatpush1.xpose.msra.mxu0 0.0
    %865 = vmatprep.subr.mxu0 0.0
    %866 = vmatpush1.xpose.msra.mxu0 0.0
    %867 = vmatprep.subr.mxu0 0.0
    %868 = vmatpush1.xpose.msra.mxu0 0.0
    %869 = vmatprep.subr.mxu0 0.0
    %870 = vmatpush1.xpose.msra.mxu0 0.0
    %871 = vmatprep.subr.mxu0 0.0
    %872 = vmatpush1.xpose.msra.mxu0 0.0
    %873 = vmatprep.subr.mxu0 0.0
    %874 = vmatpush1.xpose.msra.mxu0 0.0
    %875 = vmatprep.subr.mxu0 0.0
    %876 = vmatpush1.xpose.msra.mxu0 0.0
    %877 = vmatprep.subr.mxu0 0.0
    %878 = vmatpush1.xpose.msra.mxu0 0.0
    %879 = vmatprep.subr.mxu0 0.0
    %880 = vmatpush1.xpose.msra.mxu0 0.0
    %881 = vmatprep.subr.mxu0 0.0
    %882 = vmatpush1.xpose.msra.mxu0 0.0
    %883 = vmatprep.subr.mxu0 0.0
    %884 = vmatpush1.xpose.msra.mxu0 0.0
    %885 = vmatprep.subr.mxu0 0.0
    %886 = vmatpush1.xpose.msra.mxu0 0.0
    %887 = vmatprep.subr.mxu0 0.0
    %888 = vmatpush1.xpose.msra.mxu0 0.0
    %889 = vmatprep.subr.mxu0 0.0
    %890 = vmatpush1.xpose.msra.mxu0 0.0
    %891 = vmatprep.subr.mxu0 0.0
    %892 = vmatpush1.xpose.msra.mxu0 0.0
    %893 = vmatprep.subr.mxu0 0.0
    %894 = vmatpush1.xpose.msra.mxu0 0.0
    %895 = vmatprep.subr.mxu0 0.0
    %896 = vmatpush1.xpose.msra.mxu0 0.0
    %897 = vmatprep.subr.mxu0 0.0
    %898 = vmatpush1.xpose.msra.mxu0 0.0
    %899 = vmatprep.subr.mxu0 0.0
    %900 = vmatpush1.xpose.msra.mxu0 0.0
    %901 = vmatprep.subr.mxu0 0.0
    %902 = vmatpush1.xpose.msra.mxu0 0.0
    %903 = vmatprep.subr.mxu0 0.0
    %904 = vmatpush1.xpose.msra.mxu0 0.0
    %905 = vmatprep.subr.mxu0 0.0
    %906 = vmatpush1.xpose.msra.mxu0 0.0
    %907 = vmatprep.subr.mxu0 0.0
    %908 = vmatpush1.xpose.msra.mxu0 0.0
    %909 = vmatprep.subr.mxu0 0.0
    %910 = vmatpush1.xpose.msra.mxu0 0.0
    %911 = vmatprep.subr.mxu0 0.0
    %912 = vmatpush1.xpose.msra.mxu0 0.0
    %913 = vmatprep.subr.mxu0 0.0
    %914 = vmatpush1.xpose.msra.mxu0 0.0
    %915 = vmatprep.subr.mxu0 0.0
    %916 = vmatpush1.xpose.msra.mxu0 0.0
    %917 = vmatprep.mubr.f32.mxu0 0.0
    %918 = vmatmul.mubr.f32.gmra.mrb[0].mxu0 %v849
    %v919 = vpop.f32.mrb[0].mxu0
    %v920 = vadd.f32 0.0, %v919
    %v921 = vpop.f32.mrb[0].mxu0
    %922 = vdwg.mxu0
    %v923 = vsel %vm340, %v920, -inf
    %924 = vmax.xlane.f32.xlu0 %v923
    %v925 = vpop.xlane.xlu0 %924
    %v926 = vsub.f32 %v920, %v925
    %v927 = vmul.f32 %v926, 1.442695
    %v928 = vpow.pop %v927
    %v929 = vsel %vm340, %v928, 0.0
    %930 = vadd.xlane.f32.xlu0 %v929
    %v931 = vpop.xlane.xlu0 %930
    %v932 = vrcp.pop %v931
    %v933 = vmul.f32 %v928, %v932
    %934 = vrot.lane.b32.xlu0 %v332, 104
    %v935 = vpop.permute.xlu0 %934
    %v938 = vsel %vm340, %v933, 0
    %940 = vmatprep.subr.mxu0 0.0
    %941 = vmatpush1.msra.mxu0 %v935
    %942 = vmatprep.subr.mxu0 0.0
    %943 = vmatpush1.msra.mxu0 0.0
    %944 = vmatprep.subr.mxu0 0.0
    %945 = vmatpush1.msra.mxu0 0.0
    %946 = vmatprep.subr.mxu0 0.0
    %947 = vmatpush1.msra.mxu0 0.0
    %948 = vmatprep.subr.mxu0 0.0
    %949 = vmatpush1.msra.mxu0 0.0
    %950 = vmatprep.subr.mxu0 0.0
    %951 = vmatpush1.msra.mxu0 0.0
    %952 = vmatprep.subr.mxu0 0.0
    %953 = vmatpush1.msra.mxu0 0.0
    %954 = vmatprep.subr.mxu0 0.0
    %955 = vmatpush1.msra.mxu0 0.0
    %956 = vmatprep.subr.mxu0 0.0
    %957 = vmatpush1.msra.mxu0 0.0
    %958 = vmatprep.subr.mxu0 0.0
    %959 = vmatpush1.msra.mxu0 0.0
    %960 = vmatprep.subr.mxu0 0.0
    %961 = vmatpush1.msra.mxu0 0.0
    %962 = vmatprep.subr.mxu0 0.0
    %963 = vmatpush1.msra.mxu0 0.0
    %964 = vmatprep.subr.mxu0 0.0
    %965 = vmatpush1.msra.mxu0 0.0
    %966 = vmatprep.subr.mxu0 0.0
    %967 = vmatpush1.msra.mxu0 0.0
    %968 = vmatprep.subr.mxu0 0.0
    %969 = vmatpush1.msra.mxu0 0.0
    %970 = vmatprep.subr.mxu0 0.0
    %971 = vmatpush1.msra.mxu0 0.0
    %972 = vmatprep.subr.mxu0 0.0
    %973 = vmatpush1.msra.mxu0 0.0
    %974 = vmatprep.subr.mxu0 0.0
    %975 = vmatpush1.msra.mxu0 0.0
    %976 = vmatprep.subr.mxu0 0.0
    %977 = vmatpush1.msra.mxu0 0.0
    %978 = vmatprep.subr.mxu0 0.0
    %979 = vmatpush1.msra.mxu0 0.0
    %980 = vmatprep.subr.mxu0 0.0
    %981 = vmatpush1.msra.mxu0 0.0
    %982 = vmatprep.subr.mxu0 0.0
    %983 = vmatpush1.msra.mxu0 0.0
    %984 = vmatprep.subr.mxu0 0.0
    %985 = vmatpush1.msra.mxu0 0.0
    %986 = vmatprep.subr.mxu0 0.0
    %987 = vmatpush1.msra.mxu0 0.0
    %988 = vmatprep.subr.mxu0 0.0
    %989 = vmatpush1.msra.mxu0 0.0
    %990 = vmatprep.subr.mxu0 0.0
    %991 = vmatpush1.msra.mxu0 0.0
    %992 = vmatprep.subr.mxu0 0.0
    %993 = vmatpush1.msra.mxu0 0.0
    %994 = vmatprep.subr.mxu0 0.0
    %995 = vmatpush1.msra.mxu0 0.0
    %996 = vmatprep.subr.mxu0 0.0
    %997 = vmatpush1.msra.mxu0 0.0
    %998 = vmatprep.subr.mxu0 0.0
    %999 = vmatpush1.msra.mxu0 0.0
    %1000 = vmatprep.subr.mxu0 0.0
    %1001 = vmatpush1.msra.mxu0 0.0
    %1002 = vmatprep.subr.mxu0 0.0
    %1003 = vmatpush1.msra.mxu0 0.0
    %1004 = vmatprep.mubr.f32.mxu0 0.0
    %1005 = vmatmul.mubr.f32.gmra.mrb[0].mxu0 %v938
    %v1006 = vpop.f32.mrb[0].mxu0
    %v1007 = vadd.f32 0.0, %v1006
    %v1008 = vpop.f32.mrb[0].mxu0
    %1009 = vdwg.mxu0
    %1011 = vrot.lane.b32.xlu0 %v1007, 24
    %v1012 = vpop.permute.xlu0 %1011
    %vm1014 = vcmask 261312
    %1015 = vst.msk [vmem:[#allocation2] sm:$0xff] %vm1014, %v1012
    %v1017 = vsel %vm340, %v181, 0
    %v1020 = vsel %vm340, %v258, 0
    %1022 = vmatprep.subr.mxu0 0.0
    %1023 = vmatpush1.xpose.msra.mxu0 %v1020
    %1024 = vmatprep.subr.mxu0 0.0
    %1025 = vmatpush1.xpose.msra.mxu0 0.0
    %1026 = vmatprep.subr.mxu0 0.0
    %1027 = vmatpush1.xpose.msra.mxu0 0.0
    %1028 = vmatprep.subr.mxu0 0.0
    %1029 = vmatpush1.xpose.msra.mxu0 0.0
    %1030 = vmatprep.subr.mxu0 0.0
    %1031 = vmatpush1.xpose.msra.mxu0 0.0
    %1032 = vmatprep.subr.mxu0 0.0
    %1033 = vmatpush1.xpose.msra.mxu0 0.0
    %1034 = vmatprep.subr.mxu0 0.0
    %1035 = vmatpush1.xpose.msra.mxu0 0.0
    %1036 = vmatprep.subr.mxu0 0.0
    %1037 = vmatpush1.xpose.msra.mxu0 0.0
    %1038 = vmatprep.subr.mxu0 0.0
    %1039 = vmatpush1.xpose.msra.mxu0 0.0
    %1040 = vmatprep.subr.mxu0 0.0
    %1041 = vmatpush1.xpose.msra.mxu0 0.0
    %1042 = vmatprep.subr.mxu0 0.0
    %1043 = vmatpush1.xpose.msra.mxu0 0.0
    %1044 = vmatprep.subr.mxu0 0.0
    %1045 = vmatpush1.xpose.msra.mxu0 0.0
    %1046 = vmatprep.subr.mxu0 0.0
    %1047 = vmatpush1.xpose.msra.mxu0 0.0
    %1048 = vmatprep.subr.mxu0 0.0
    %1049 = vmatpush1.xpose.msra.mxu0 0.0
    %1050 = vmatprep.subr.mxu0 0.0
    %1051 = vmatpush1.xpose.msra.mxu0 0.0
    %1052 = vmatprep.subr.mxu0 0.0
    %1053 = vmatpush1.xpose.msra.mxu0 0.0
    %1054 = vmatprep.subr.mxu0 0.0
    %1055 = vmatpush1.xpose.msra.mxu0 0.0
    %1056 = vmatprep.subr.mxu0 0.0
    %1057 = vmatpush1.xpose.msra.mxu0 0.0
    %1058 = vmatprep.subr.mxu0 0.0
    %1059 = vmatpush1.xpose.msra.mxu0 0.0
    %1060 = vmatprep.subr.mxu0 0.0
    %1061 = vmatpush1.xpose.msra.mxu0 0.0
    %1062 = vmatprep.subr.mxu0 0.0
    %1063 = vmatpush1.xpose.msra.mxu0 0.0
    %1064 = vmatprep.subr.mxu0 0.0
    %1065 = vmatpush1.xpose.msra.mxu0 0.0
    %1066 = vmatprep.subr.mxu0 0.0
    %1067 = vmatpush1.xpose.msra.mxu0 0.0
    %1068 = vmatprep.subr.mxu0 0.0
    %1069 = vmatpush1.xpose.msra.mxu0 0.0
    %1070 = vmatprep.subr.mxu0 0.0
    %1071 = vmatpush1.xpose.msra.mxu0 0.0
    %1072 = vmatprep.subr.mxu0 0.0
    %1073 = vmatpush1.xpose.msra.mxu0 0.0
    %1074 = vmatprep.subr.mxu0 0.0
    %1075 = vmatpush1.xpose.msra.mxu0 0.0
    %1076 = vmatprep.subr.mxu0 0.0
    %1077 = vmatpush1.xpose.msra.mxu0 0.0
    %1078 = vmatprep.subr.mxu0 0.0
    %1079 = vmatpush1.xpose.msra.mxu0 0.0
    %1080 = vmatprep.subr.mxu0 0.0
    %1081 = vmatpush1.xpose.msra.mxu0 0.0
    %1082 = vmatprep.subr.mxu0 0.0
    %1083 = vmatpush1.xpose.msra.mxu0 0.0
    %1084 = vmatprep.subr.mxu0 0.0
    %1085 = vmatpush1.xpose.msra.mxu0 0.0
    %1086 = vmatprep.mubr.f32.mxu0 0.0
    %1087 = vmatmul.mubr.f32.gmra.mrb[0].mxu0 %v1017
    %v1088 = vpop.f32.mrb[0].mxu0
    %v1089 = vadd.f32 0.0, %v1088
    %v1090 = vpop.f32.mrb[0].mxu0
    %1091 = vdwg.mxu0
    %v1092 = vsel %vm340, %v1089, -inf
    %1093 = vmax.xlane.f32.xlu0 %v1092
    %v1094 = vpop.xlane.xlu0 %1093
    %v1095 = vsub.f32 %v1089, %v1094
    %v1096 = vmul.f32 %v1095, 1.442695
    %v1097 = vpow.pop %v1096
    %v1098 = vsel %vm340, %v1097, 0.0
    %1099 = vadd.xlane.f32.xlu0 %v1098
    %v1100 = vpop.xlane.xlu0 %1099
    %v1101 = vrcp.pop %v1100
    %v1102 = vmul.f32 %v1097, %v1101
    %v1104 = vsel %vm340, %v1102, 0
    %1106 = vmatprep.subr.mxu0 0.0
    %1107 = vmatpush1.msra.mxu0 %v337
    %1108 = vmatprep.subr.mxu0 0.0
    %1109 = vmatpush1.msra.mxu0 0.0
    %1110 = vmatprep.subr.mxu0 0.0
    %1111 = vmatpush1.msra.mxu0 0.0
    %1112 = vmatprep.subr.mxu0 0.0
    %1113 = vmatpush1.msra.mxu0 0.0
    %1114 = vmatprep.subr.mxu0 0.0
    %1115 = vmatpush1.msra.mxu0 0.0
    %1116 = vmatprep.subr.mxu0 0.0
    %1117 = vmatpush1.msra.mxu0 0.0
    %1118 = vmatprep.subr.mxu0 0.0
    %1119 = vmatpush1.msra.mxu0 0.0
    %1120 = vmatprep.subr.mxu0 0.0
    %1121 = vmatpush1.msra.mxu0 0.0
    %1122 = vmatprep.subr.mxu0 0.0
    %1123 = vmatpush1.msra.mxu0 0.0
    %1124 = vmatprep.subr.mxu0 0.0
    %1125 = vmatpush1.msra.mxu0 0.0
    %1126 = vmatprep.subr.mxu0 0.0
    %1127 = vmatpush1.msra.mxu0 0.0
    %1128 = vmatprep.subr.mxu0 0.0
    %1129 = vmatpush1.msra.mxu0 0.0
    %1130 = vmatprep.subr.mxu0 0.0
    %1131 = vmatpush1.msra.mxu0 0.0
    %1132 = vmatprep.subr.mxu0 0.0
    %1133 = vmatpush1.msra.mxu0 0.0
    %1134 = vmatprep.subr.mxu0 0.0
    %1135 = vmatpush1.msra.mxu0 0.0
    %1136 = vmatprep.subr.mxu0 0.0
    %1137 = vmatpush1.msra.mxu0 0.0
    %1138 = vmatprep.subr.mxu0 0.0
    %1139 = vmatpush1.msra.mxu0 0.0
    %1140 = vmatprep.subr.mxu0 0.0
    %1141 = vmatpush1.msra.mxu0 0.0
    %1142 = vmatprep.subr.mxu0 0.0
    %1143 = vmatpush1.msra.mxu0 0.0
    %1144 = vmatprep.subr.mxu0 0.0
    %1145 = vmatpush1.msra.mxu0 0.0
    %1146 = vmatprep.subr.mxu0 0.0
    %1147 = vmatpush1.msra.mxu0 0.0
    %1148 = vmatprep.subr.mxu0 0.0
    %1149 = vmatpush1.msra.mxu0 0.0
    %1150 = vmatprep.subr.mxu0 0.0
    %1151 = vmatpush1.msra.mxu0 0.0
    %1152 = vmatprep.subr.mxu0 0.0
    %1153 = vmatpush1.msra.mxu0 0.0
    %1154 = vmatprep.subr.mxu0 0.0
    %1155 = vmatpush1.msra.mxu0 0.0
    %1156 = vmatprep.subr.mxu0 0.0
    %1157 = vmatpush1.msra.mxu0 0.0
    %1158 = vmatprep.subr.mxu0 0.0
    %1159 = vmatpush1.msra.mxu0 0.0
    %1160 = vmatprep.subr.mxu0 0.0
    %1161 = vmatpush1.msra.mxu0 0.0
    %1162 = vmatprep.subr.mxu0 0.0
    %1163 = vmatpush1.msra.mxu0 0.0
    %1164 = vmatprep.subr.mxu0 0.0
    %1165 = vmatpush1.msra.mxu0 0.0
    %1166 = vmatprep.subr.mxu0 0.0
    %1167 = vmatpush1.msra.mxu0 0.0
    %1168 = vmatprep.subr.mxu0 0.0
    %1169 = vmatpush1.msra.mxu0 0.0
    %1170 = vmatprep.mubr.f32.mxu0 0.0
    %1171 = vmatmul.mubr.f32.gmra.mrb[0].mxu0 %v1104
    %v1172 = vpop.f32.mrb[0].mxu0
    %v1173 = vadd.f32 0.0, %v1172
    %v1174 = vpop.f32.mrb[0].mxu0
    %1175 = vdwg.mxu0
    %1176 = vst.msk [vmem:[#allocation2 + $0x8] sm:$0xff] %vm340, %v1173
    %1177 = vrot.lane.b32.xlu0 %v181, 120
    %v1178 = vpop.permute.xlu0 %1177
    %1179 = vrot.lane.b32.xlu0 %v258, 120
    %v1180 = vpop.permute.xlu0 %1179
    %v1181 = vsel %vm340, %v1178, 0
    %v1183 = vsel %vm340, %v1180, 0
    %1185 = vmatprep.subr.mxu0 0.0
    %1186 = vmatpush1.xpose.msra.mxu0 %v1183
    %1187 = vmatprep.subr.mxu0 0.0
    %1188 = vmatpush1.xpose.msra.mxu0 0.0
    %1189 = vmatprep.subr.mxu0 0.0
    %1190 = vmatpush1.xpose.msra.mxu0 0.0
    %1191 = vmatprep.subr.mxu0 0.0
    %1192 = vmatpush1.xpose.msra.mxu0 0.0
    %1193 = vmatprep.subr.mxu0 0.0
    %1194 = vmatpush1.xpose.msra.mxu0 0.0
    %1195 = vmatprep.subr.mxu0 0.0
    %1196 = vmatpush1.xpose.msra.mxu0 0.0
    %1197 = vmatprep.subr.mxu0 0.0
    %1198 = vmatpush1.xpose.msra.mxu0 0.0
    %1199 = vmatprep.subr.mxu0 0.0
    %1200 = vmatpush1.xpose.msra.mxu0 0.0
    %1201 = vmatprep.subr.mxu0 0.0
    %1202 = vmatpush1.xpose.msra.mxu0 0.0
    %1203 = vmatprep.subr.mxu0 0.0
    %1204 = vmatpush1.xpose.msra.mxu0 0.0
    %1205 = vmatprep.subr.mxu0 0.0
    %1206 = vmatpush1.xpose.msra.mxu0 0.0
    %1207 = vmatprep.subr.mxu0 0.0
    %1208 = vmatpush1.xpose.msra.mxu0 0.0
    %1209 = vmatprep.subr.mxu0 0.0
    %1210 = vmatpush1.xpose.msra.mxu0 0.0
    %1211 = vmatprep.subr.mxu0 0.0
    %1212 = vmatpush1.xpose.msra.mxu0 0.0
    %1213 = vmatprep.subr.mxu0 0.0
    %1214 = vmatpush1.xpose.msra.mxu0 0.0
    %1215 = vmatprep.subr.mxu0 0.0
    %1216 = vmatpush1.xpose.msra.mxu0 0.0
    %1217 = vmatprep.subr.mxu0 0.0
    %1218 = vmatpush1.xpose.msra.mxu0 0.0
    %1219 = vmatprep.subr.mxu0 0.0
    %1220 = vmatpush1.xpose.msra.mxu0 0.0
    %1221 = vmatprep.subr.mxu0 0.0
    %1222 = vmatpush1.xpose.msra.mxu0 0.0
    %1223 = vmatprep.subr.mxu0 0.0
    %1224 = vmatpush1.xpose.msra.mxu0 0.0
    %1225 = vmatprep.subr.mxu0 0.0
    %1226 = vmatpush1.xpose.msra.mxu0 0.0
    %1227 = vmatprep.subr.mxu0 0.0
    %1228 = vmatpush1.xpose.msra.mxu0 0.0
    %1229 = vmatprep.subr.mxu0 0.0
    %1230 = vmatpush1.xpose.msra.mxu0 0.0
    %1231 = vmatprep.subr.mxu0 0.0
    %1232 = vmatpush1.xpose.msra.mxu0 0.0
    %1233 = vmatprep.subr.mxu0 0.0
    %1234 = vmatpush1.xpose.msra.mxu0 0.0
    %1235 = vmatprep.subr.mxu0 0.0
    %1236 = vmatpush1.xpose.msra.mxu0 0.0
    %1237 = vmatprep.subr.mxu0 0.0
    %1238 = vmatpush1.xpose.msra.mxu0 0.0
    %1239 = vmatprep.subr.mxu0 0.0
    %1240 = vmatpush1.xpose.msra.mxu0 0.0
    %1241 = vmatprep.subr.mxu0 0.0
    %1242 = vmatpush1.xpose.msra.mxu0 0.0
    %1243 = vmatprep.subr.mxu0 0.0
    %1244 = vmatpush1.xpose.msra.mxu0 0.0
    %1245 = vmatprep.subr.mxu0 0.0
    %1246 = vmatpush1.xpose.msra.mxu0 0.0
    %1247 = vmatprep.subr.mxu0 0.0
    %1248 = vmatpush1.xpose.msra.mxu0 0.0
    %1249 = vmatprep.mubr.f32.mxu0 0.0
    %1250 = vmatmul.mubr.f32.gmra.mrb[0].mxu0 %v1181
    %v1251 = vpop.f32.mrb[0].mxu0
    %v1252 = vadd.f32 0.0, %v1251
    %v1253 = vpop.f32.mrb[0].mxu0
    %1254 = vdwg.mxu0
    %v1255 = vsel %vm340, %v1252, -inf
    %1256 = vmax.xlane.f32.xlu0 %v1255
    %v1257 = vpop.xlane.xlu0 %1256
    %v1258 = vsub.f32 %v1252, %v1257
    %v1259 = vmul.f32 %v1258, 1.442695
    %v1260 = vpow.pop %v1259
    %v1261 = vsel %vm340, %v1260, 0.0
    %1262 = vadd.xlane.f32.xlu0 %v1261
    %v1263 = vpop.xlane.xlu0 %1262
    %v1264 = vrcp.pop %v1263
    %v1265 = vmul.f32 %v1260, %v1264
    %1267 = vrot.lane.b32.xlu0 %v337, 120
    %v1268 = vpop.permute.xlu0 %1267
    %v1271 = vsel %vm340, %v1265, 0
    %1273 = vmatprep.subr.mxu0 0.0
    %1274 = vmatpush1.msra.mxu0 %v1268
    %1275 = vmatprep.subr.mxu0 0.0
    %1276 = vmatpush1.msra.mxu0 0.0
    %1277 = vmatprep.subr.mxu0 0.0
    %1278 = vmatpush1.msra.mxu0 0.0
    %1279 = vmatprep.subr.mxu0 0.0
    %1280 = vmatpush1.msra.mxu0 0.0
    %1281 = vmatprep.subr.mxu0 0.0
    %1282 = vmatpush1.msra.mxu0 0.0
    %1283 = vmatprep.subr.mxu0 0.0
    %1284 = vmatpush1.msra.mxu0 0.0
    %1285 = vmatprep.subr.mxu0 0.0
    %1286 = vmatpush1.msra.mxu0 0.0
    %1287 = vmatprep.subr.mxu0 0.0
    %1288 = vmatpush1.msra.mxu0 0.0
    %1289 = vmatprep.subr.mxu0 0.0
    %1290 = vmatpush1.msra.mxu0 0.0
    %1291 = vmatprep.subr.mxu0 0.0
    %1292 = vmatpush1.msra.mxu0 0.0
    %1293 = vmatprep.subr.mxu0 0.0
    %1294 = vmatpush1.msra.mxu0 0.0
    %1295 = vmatprep.subr.mxu0 0.0
    %1296 = vmatpush1.msra.mxu0 0.0
    %1297 = vmatprep.subr.mxu0 0.0
    %1298 = vmatpush1.msra.mxu0 0.0
    %1299 = vmatprep.subr.mxu0 0.0
    %1300 = vmatpush1.msra.mxu0 0.0
    %1301 = vmatprep.subr.mxu0 0.0
    %1302 = vmatpush1.msra.mxu0 0.0
    %1303 = vmatprep.subr.mxu0 0.0
    %1304 = vmatpush1.msra.mxu0 0.0
    %1305 = vmatprep.subr.mxu0 0.0
    %1306 = vmatpush1.msra.mxu0 0.0
    %1307 = vmatprep.subr.mxu0 0.0
    %1308 = vmatpush1.msra.mxu0 0.0
    %1309 = vmatprep.subr.mxu0 0.0
    %1310 = vmatpush1.msra.mxu0 0.0
    %1311 = vmatprep.subr.mxu0 0.0
    %1312 = vmatpush1.msra.mxu0 0.0
    %1313 = vmatprep.subr.mxu0 0.0
    %1314 = vmatpush1.msra.mxu0 0.0
    %1315 = vmatprep.subr.mxu0 0.0
    %1316 = vmatpush1.msra.mxu0 0.0
    %1317 = vmatprep.subr.mxu0 0.0
    %1318 = vmatpush1.msra.mxu0 0.0
    %1319 = vmatprep.subr.mxu0 0.0
    %1320 = vmatpush1.msra.mxu0 0.0
    %1321 = vmatprep.subr.mxu0 0.0
    %1322 = vmatpush1.msra.mxu0 0.0
    %1323 = vmatprep.subr.mxu0 0.0
    %1324 = vmatpush1.msra.mxu0 0.0
    %1325 = vmatprep.subr.mxu0 0.0
    %1326 = vmatpush1.msra.mxu0 0.0
    %1327 = vmatprep.subr.mxu0 0.0
    %1328 = vmatpush1.msra.mxu0 0.0
    %1329 = vmatprep.subr.mxu0 0.0
    %1330 = vmatpush1.msra.mxu0 0.0
    %1331 = vmatprep.subr.mxu0 0.0
    %1332 = vmatpush1.msra.mxu0 0.0
    %1333 = vmatprep.subr.mxu0 0.0
    %1334 = vmatpush1.msra.mxu0 0.0
    %1335 = vmatprep.subr.mxu0 0.0
    %1336 = vmatpush1.msra.mxu0 0.0
    %1337 = vmatprep.mubr.f32.mxu0 0.0
    %1338 = vmatmul.mubr.f32.gmra.mrb[0].mxu0 %v1271
    %v1339 = vpop.f32.mrb[0].mxu0
    %v1340 = vadd.f32 0.0, %v1339
    %v1341 = vpop.f32.mrb[0].mxu0
    %1342 = vdwg.mxu0
    %1344 = vrot.lane.b32.xlu0 %v1340, 8
    %v1345 = vpop.permute.xlu0 %1344
    %1347 = vst.msk [vmem:[#allocation2 + $0x8] sm:$0xff] %vm672, %v1345
    %1348 = vrot.lane.b32.xlu0 %v181, 112
    %v1349 = vpop.permute.xlu0 %1348
    %1350 = vrot.lane.b32.xlu0 %v258, 112
    %v1351 = vpop.permute.xlu0 %1350
    %v1352 = vsel %vm340, %v1349, 0
    %v1354 = vsel %vm340, %v1351, 0
    %1356 = vmatprep.subr.mxu0 0.0
    %1357 = vmatpush1.xpose.msra.mxu0 %v1354
    %1358 = vmatprep.subr.mxu0 0.0
    %1359 = vmatpush1.xpose.msra.mxu0 0.0
    %1360 = vmatprep.subr.mxu0 0.0
    %1361 = vmatpush1.xpose.msra.mxu0 0.0
    %1362 = vmatprep.subr.mxu0 0.0
    %1363 = vmatpush1.xpose.msra.mxu0 0.0
    %1364 = vmatprep.subr.mxu0 0.0
    %1365 = vmatpush1.xpose.msra.mxu0 0.0
    %1366 = vmatprep.subr.mxu0 0.0
    %1367 = vmatpush1.xpose.msra.mxu0 0.0
    %1368 = vmatprep.subr.mxu0 0.0
    %1369 = vmatpush1.xpose.msra.mxu0 0.0
    %1370 = vmatprep.subr.mxu0 0.0
    %1371 = vmatpush1.xpose.msra.mxu0 0.0
    %1372 = vmatprep.subr.mxu0 0.0
    %1373 = vmatpush1.xpose.msra.mxu0 0.0
    %1374 = vmatprep.subr.mxu0 0.0
    %1375 = vmatpush1.xpose.msra.mxu0 0.0
    %1376 = vmatprep.subr.mxu0 0.0
    %1377 = vmatpush1.xpose.msra.mxu0 0.0
    %1378 = vmatprep.subr.mxu0 0.0
    %1379 = vmatpush1.xpose.msra.mxu0 0.0
    %1380 = vmatprep.subr.mxu0 0.0
    %1381 = vmatpush1.xpose.msra.mxu0 0.0
    %1382 = vmatprep.subr.mxu0 0.0
    %1383 = vmatpush1.xpose.msra.mxu0 0.0
    %1384 = vmatprep.subr.mxu0 0.0
    %1385 = vmatpush1.xpose.msra.mxu0 0.0
    %1386 = vmatprep.subr.mxu0 0.0
    %1387 = vmatpush1.xpose.msra.mxu0 0.0
    %1388 = vmatprep.subr.mxu0 0.0
    %1389 = vmatpush1.xpose.msra.mxu0 0.0
    %1390 = vmatprep.subr.mxu0 0.0
    %1391 = vmatpush1.xpose.msra.mxu0 0.0
    %1392 = vmatprep.subr.mxu0 0.0
    %1393 = vmatpush1.xpose.msra.mxu0 0.0
    %1394 = vmatprep.subr.mxu0 0.0
    %1395 = vmatpush1.xpose.msra.mxu0 0.0
    %1396 = vmatprep.subr.mxu0 0.0
    %1397 = vmatpush1.xpose.msra.mxu0 0.0
    %1398 = vmatprep.subr.mxu0 0.0
    %1399 = vmatpush1.xpose.msra.mxu0 0.0
    %1400 = vmatprep.subr.mxu0 0.0
    %1401 = vmatpush1.xpose.msra.mxu0 0.0
    %1402 = vmatprep.subr.mxu0 0.0
    %1403 = vmatpush1.xpose.msra.mxu0 0.0
    %1404 = vmatprep.subr.mxu0 0.0
    %1405 = vmatpush1.xpose.msra.mxu0 0.0
    %1406 = vmatprep.subr.mxu0 0.0
    %1407 = vmatpush1.xpose.msra.mxu0 0.0
    %1408 = vmatprep.subr.mxu0 0.0
    %1409 = vmatpush1.xpose.msra.mxu0 0.0
    %1410 = vmatprep.subr.mxu0 0.0
    %1411 = vmatpush1.xpose.msra.mxu0 0.0
    %1412 = vmatprep.subr.mxu0 0.0
    %1413 = vmatpush1.xpose.msra.mxu0 0.0
    %1414 = vmatprep.subr.mxu0 0.0
    %1415 = vmatpush1.xpose.msra.mxu0 0.0
    %1416 = vmatprep.subr.mxu0 0.0
    %1417 = vmatpush1.xpose.msra.mxu0 0.0
    %1418 = vmatprep.subr.mxu0 0.0
    %1419 = vmatpush1.xpose.msra.mxu0 0.0
    %1420 = vmatprep.mubr.f32.mxu0 0.0
    %1421 = vmatmul.mubr.f32.gmra.mrb[0].mxu0 %v1352
    %v1422 = vpop.f32.mrb[0].mxu0
    %v1423 = vadd.f32 0.0, %v1422
    %v1424 = vpop.f32.mrb[0].mxu0
    %1425 = vdwg.mxu0
    %v1426 = vsel %vm340, %v1423, -inf
    %1427 = vmax.xlane.f32.xlu0 %v1426
    %v1428 = vpop.xlane.xlu0 %1427
    %v1429 = vsub.f32 %v1423, %v1428
    %v1430 = vmul.f32 %v1429, 1.442695
    %v1431 = vpow.pop %v1430
    %v1432 = vsel %vm340, %v1431, 0.0
    %1433 = vadd.xlane.f32.xlu0 %v1432
    %v1434 = vpop.xlane.xlu0 %1433
    %v1435 = vrcp.pop %v1434
    %v1436 = vmul.f32 %v1431, %v1435
    %1437 = vrot.lane.b32.xlu0 %v337, 112
    %v1438 = vpop.permute.xlu0 %1437
    %v1441 = vsel %vm340, %v1436, 0
    %1443 = vmatprep.subr.mxu0 0.0
    %1444 = vmatpush1.msra.mxu0 %v1438
    %1445 = vmatprep.subr.mxu0 0.0
    %1446 = vmatpush1.msra.mxu0 0.0
    %1447 = vmatprep.subr.mxu0 0.0
    %1448 = vmatpush1.msra.mxu0 0.0
    %1449 = vmatprep.subr.mxu0 0.0
    %1450 = vmatpush1.msra.mxu0 0.0
    %1451 = vmatprep.subr.mxu0 0.0
    %1452 = vmatpush1.msra.mxu0 0.0
    %1453 = vmatprep.subr.mxu0 0.0
    %1454 = vmatpush1.msra.mxu0 0.0
    %1455 = vmatprep.subr.mxu0 0.0
    %1456 = vmatpush1.msra.mxu0 0.0
    %1457 = vmatprep.subr.mxu0 0.0
    %1458 = vmatpush1.msra.mxu0 0.0
    %1459 = vmatprep.subr.mxu0 0.0
    %1460 = vmatpush1.msra.mxu0 0.0
    %1461 = vmatprep.subr.mxu0 0.0
    %1462 = vmatpush1.msra.mxu0 0.0
    %1463 = vmatprep.subr.mxu0 0.0
    %1464 = vmatpush1.msra.mxu0 0.0
    %1465 = vmatprep.subr.mxu0 0.0
    %1466 = vmatpush1.msra.mxu0 0.0
    %1467 = vmatprep.subr.mxu0 0.0
    %1468 = vmatpush1.msra.mxu0 0.0
    %1469 = vmatprep.subr.mxu0 0.0
    %1470 = vmatpush1.msra.mxu0 0.0
    %1471 = vmatprep.subr.mxu0 0.0
    %1472 = vmatpush1.msra.mxu0 0.0
    %1473 = vmatprep.subr.mxu0 0.0
    %1474 = vmatpush1.msra.mxu0 0.0
    %1475 = vmatprep.subr.mxu0 0.0
    %1476 = vmatpush1.msra.mxu0 0.0
    %1477 = vmatprep.subr.mxu0 0.0
    %1478 = vmatpush1.msra.mxu0 0.0
    %1479 = vmatprep.subr.mxu0 0.0
    %1480 = vmatpush1.msra.mxu0 0.0
    %1481 = vmatprep.subr.mxu0 0.0
    %1482 = vmatpush1.msra.mxu0 0.0
    %1483 = vmatprep.subr.mxu0 0.0
    %1484 = vmatpush1.msra.mxu0 0.0
    %1485 = vmatprep.subr.mxu0 0.0
    %1486 = vmatpush1.msra.mxu0 0.0
    %1487 = vmatprep.subr.mxu0 0.0
    %1488 = vmatpush1.msra.mxu0 0.0
    %1489 = vmatprep.subr.mxu0 0.0
    %1490 = vmatpush1.msra.mxu0 0.0
    %1491 = vmatprep.subr.mxu0 0.0
    %1492 = vmatpush1.msra.mxu0 0.0
    %1493 = vmatprep.subr.mxu0 0.0
    %1494 = vmatpush1.msra.mxu0 0.0
    %1495 = vmatprep.subr.mxu0 0.0
    %1496 = vmatpush1.msra.mxu0 0.0
    %1497 = vmatprep.subr.mxu0 0.0
    %1498 = vmatpush1.msra.mxu0 0.0
    %1499 = vmatprep.subr.mxu0 0.0
    %1500 = vmatpush1.msra.mxu0 0.0
    %1501 = vmatprep.subr.mxu0 0.0
    %1502 = vmatpush1.msra.mxu0 0.0
    %1503 = vmatprep.subr.mxu0 0.0
    %1504 = vmatpush1.msra.mxu0 0.0
    %1505 = vmatprep.subr.mxu0 0.0
    %1506 = vmatpush1.msra.mxu0 0.0
    %1507 = vmatprep.mubr.f32.mxu0 0.0
    %1508 = vmatmul.mubr.f32.gmra.mrb[0].mxu0 %v1441
    %v1509 = vpop.f32.mrb[0].mxu0
    %v1510 = vadd.f32 0.0, %v1509
    %v1511 = vpop.f32.mrb[0].mxu0
    %1512 = vdwg.mxu0
    %1514 = vrot.lane.b32.xlu0 %v1510, 16
    %v1515 = vpop.permute.xlu0 %1514
    %1517 = vst.msk [vmem:[#allocation2 + $0x8] sm:$0xff] %vm843, %v1515
    %1518 = vrot.lane.b32.xlu0 %v181, 104
    %v1519 = vpop.permute.xlu0 %1518
    %1520 = vrot.lane.b32.xlu0 %v258, 104
    %v1521 = vpop.permute.xlu0 %1520
    %v1522 = vsel %vm340, %v1519, 0
    %v1524 = vsel %vm340, %v1521, 0
    %1526 = vmatprep.subr.mxu0 0.0
    %1527 = vmatpush1.xpose.msra.mxu0 %v1524
    %1528 = vmatprep.subr.mxu0 0.0
    %1529 = vmatpush1.xpose.msra.mxu0 0.0
    %1530 = vmatprep.subr.mxu0 0.0
    %1531 = vmatpush1.xpose.msra.mxu0 0.0
    %1532 = vmatprep.subr.mxu0 0.0
    %1533 = vmatpush1.xpose.msra.mxu0 0.0
    %1534 = vmatprep.subr.mxu0 0.0
    %1535 = vmatpush1.xpose.msra.mxu0 0.0
    %1536 = vmatprep.subr.mxu0 0.0
    %1537 = vmatpush1.xpose.msra.mxu0 0.0
    %1538 = vmatprep.subr.mxu0 0.0
    %1539 = vmatpush1.xpose.msra.mxu0 0.0
    %1540 = vmatprep.subr.mxu0 0.0
    %1541 = vmatpush1.xpose.msra.mxu0 0.0
    %1542 = vmatprep.subr.mxu0 0.0
    %1543 = vmatpush1.xpose.msra.mxu0 0.0
    %1544 = vmatprep.subr.mxu0 0.0
    %1545 = vmatpush1.xpose.msra.mxu0 0.0
    %1546 = vmatprep.subr.mxu0 0.0
    %1547 = vmatpush1.xpose.msra.mxu0 0.0
    %1548 = vmatprep.subr.mxu0 0.0
    %1549 = vmatpush1.xpose.msra.mxu0 0.0
    %1550 = vmatprep.subr.mxu0 0.0
    %1551 = vmatpush1.xpose.msra.mxu0 0.0
    %1552 = vmatprep.subr.mxu0 0.0
    %1553 = vmatpush1.xpose.msra.mxu0 0.0
    %1554 = vmatprep.subr.mxu0 0.0
    %1555 = vmatpush1.xpose.msra.mxu0 0.0
    %1556 = vmatprep.subr.mxu0 0.0
    %1557 = vmatpush1.xpose.msra.mxu0 0.0
    %1558 = vmatprep.subr.mxu0 0.0
    %1559 = vmatpush1.xpose.msra.mxu0 0.0
    %1560 = vmatprep.subr.mxu0 0.0
    %1561 = vmatpush1.xpose.msra.mxu0 0.0
    %1562 = vmatprep.subr.mxu0 0.0
    %1563 = vmatpush1.xpose.msra.mxu0 0.0
    %1564 = vmatprep.subr.mxu0 0.0
    %1565 = vmatpush1.xpose.msra.mxu0 0.0
    %1566 = vmatprep.subr.mxu0 0.0
    %1567 = vmatpush1.xpose.msra.mxu0 0.0
    %1568 = vmatprep.subr.mxu0 0.0
    %1569 = vmatpush1.xpose.msra.mxu0 0.0
    %1570 = vmatprep.subr.mxu0 0.0
    %1571 = vmatpush1.xpose.msra.mxu0 0.0
    %1572 = vmatprep.subr.mxu0 0.0
    %1573 = vmatpush1.xpose.msra.mxu0 0.0
    %1574 = vmatprep.subr.mxu0 0.0
    %1575 = vmatpush1.xpose.msra.mxu0 0.0
    %1576 = vmatprep.subr.mxu0 0.0
    %1577 = vmatpush1.xpose.msra.mxu0 0.0
    %1578 = vmatprep.subr.mxu0 0.0
    %1579 = vmatpush1.xpose.msra.mxu0 0.0
    %1580 = vmatprep.subr.mxu0 0.0
    %1581 = vmatpush1.xpose.msra.mxu0 0.0
    %1582 = vmatprep.subr.mxu0 0.0
    %1583 = vmatpush1.xpose.msra.mxu0 0.0
    %1584 = vmatprep.subr.mxu0 0.0
    %1585 = vmatpush1.xpose.msra.mxu0 0.0
    %1586 = vmatprep.subr.mxu0 0.0
    %1587 = vmatpush1.xpose.msra.mxu0 0.0
    %1588 = vmatprep.subr.mxu0 0.0
    %1589 = vmatpush1.xpose.msra.mxu0 0.0
    %1590 = vmatprep.mubr.f32.mxu0 0.0
    %1591 = vmatmul.mubr.f32.gmra.mrb[0].mxu0 %v1522
    %v1592 = vpop.f32.mrb[0].mxu0
    %v1593 = vadd.f32 0.0, %v1592
    %v1594 = vpop.f32.mrb[0].mxu0
    %1595 = vdwg.mxu0
    %v1596 = vsel %vm340, %v1593, -inf
    %1597 = vmax.xlane.f32.xlu0 %v1596
    %v1598 = vpop.xlane.xlu0 %1597
    %v1599 = vsub.f32 %v1593, %v1598
    %v1600 = vmul.f32 %v1599, 1.442695
    %v1601 = vpow.pop %v1600
    %v1602 = vsel %vm340, %v1601, 0.0
    %1603 = vadd.xlane.f32.xlu0 %v1602
    %v1604 = vpop.xlane.xlu0 %1603
    %v1605 = vrcp.pop %v1604
    %v1606 = vmul.f32 %v1601, %v1605
    %1607 = vrot.lane.b32.xlu0 %v337, 104
    %v1608 = vpop.permute.xlu0 %1607
    %v1611 = vsel %vm340, %v1606, 0
    %1613 = vmatprep.subr.mxu0 0.0
    %1614 = vmatpush1.msra.mxu0 %v1608
    %1615 = vmatprep.subr.mxu0 0.0
    %1616 = vmatpush1.msra.mxu0 0.0
    %1617 = vmatprep.subr.mxu0 0.0
    %1618 = vmatpush1.msra.mxu0 0.0
    %1619 = vmatprep.subr.mxu0 0.0
    %1620 = vmatpush1.msra.mxu0 0.0
    %1621 = vmatprep.subr.mxu0 0.0
    %1622 = vmatpush1.msra.mxu0 0.0
    %1623 = vmatprep.subr.mxu0 0.0
    %1624 = vmatpush1.msra.mxu0 0.0
    %1625 = vmatprep.subr.mxu0 0.0
    %1626 = vmatpush1.msra.mxu0 0.0
    %1627 = vmatprep.subr.mxu0 0.0
    %1628 = vmatpush1.msra.mxu0 0.0
    %1629 = vmatprep.subr.mxu0 0.0
    %1630 = vmatpush1.msra.mxu0 0.0
    %1631 = vmatprep.subr.mxu0 0.0
    %1632 = vmatpush1.msra.mxu0 0.0
    %1633 = vmatprep.subr.mxu0 0.0
    %1634 = vmatpush1.msra.mxu0 0.0
    %1635 = vmatprep.subr.mxu0 0.0
    %1636 = vmatpush1.msra.mxu0 0.0
    %1637 = vmatprep.subr.mxu0 0.0
    %1638 = vmatpush1.msra.mxu0 0.0
    %1639 = vmatprep.subr.mxu0 0.0
    %1640 = vmatpush1.msra.mxu0 0.0
    %1641 = vmatprep.subr.mxu0 0.0
    %1642 = vmatpush1.msra.mxu0 0.0
    %1643 = vmatprep.subr.mxu0 0.0
    %1644 = vmatpush1.msra.mxu0 0.0
    %1645 = vmatprep.subr.mxu0 0.0
    %1646 = vmatpush1.msra.mxu0 0.0
    %1647 = vmatprep.subr.mxu0 0.0
    %1648 = vmatpush1.msra.mxu0 0.0
    %1649 = vmatprep.subr.mxu0 0.0
    %1650 = vmatpush1.msra.mxu0 0.0
    %1651 = vmatprep.subr.mxu0 0.0
    %1652 = vmatpush1.msra.mxu0 0.0
    %1653 = vmatprep.subr.mxu0 0.0
    %1654 = vmatpush1.msra.mxu0 0.0
    %1655 = vmatprep.subr.mxu0 0.0
    %1656 = vmatpush1.msra.mxu0 0.0
    %1657 = vmatprep.subr.mxu0 0.0
    %1658 = vmatpush1.msra.mxu0 0.0
    %1659 = vmatprep.subr.mxu0 0.0
    %1660 = vmatpush1.msra.mxu0 0.0
    %1661 = vmatprep.subr.mxu0 0.0
    %1662 = vmatpush1.msra.mxu0 0.0
    %1663 = vmatprep.subr.mxu0 0.0
    %1664 = vmatpush1.msra.mxu0 0.0
    %1665 = vmatprep.subr.mxu0 0.0
    %1666 = vmatpush1.msra.mxu0 0.0
    %1667 = vmatprep.subr.mxu0 0.0
    %1668 = vmatpush1.msra.mxu0 0.0
    %1669 = vmatprep.subr.mxu0 0.0
    %1670 = vmatpush1.msra.mxu0 0.0
    %1671 = vmatprep.subr.mxu0 0.0
    %1672 = vmatpush1.msra.mxu0 0.0
    %1673 = vmatprep.subr.mxu0 0.0
    %1674 = vmatpush1.msra.mxu0 0.0
    %1675 = vmatprep.subr.mxu0 0.0
    %1676 = vmatpush1.msra.mxu0 0.0
    %1677 = vmatprep.mubr.f32.mxu0 0.0
    %1678 = vmatmul.mubr.f32.gmra.mrb[0].mxu0 %v1611
    %v1679 = vpop.f32.mrb[0].mxu0
    %v1680 = vadd.f32 0.0, %v1679
    %v1681 = vpop.f32.mrb[0].mxu0
    %1682 = vdwg.mxu0
    %1684 = vrot.lane.b32.xlu0 %v1680, 24
    %v1685 = vpop.permute.xlu0 %1684
    %1687 = vst.msk [vmem:[#allocation2 + $0x8] sm:$0xff] %vm1014, %v1685
    %v1688 = vld [vmem:[#allocation2] sm:$0xff]
    %v1689 = vld [vmem:[#allocation2 + $0x8] sm:$0xff]
    %v1690 = vld [vmem:[#allocation11] sm:$0xff]
    %v1691 = vld [vmem:[#allocation11 + $0x8] sm:$0xff]
    %v1692 = vld [vmem:[#allocation11 + $0x10] sm:$0xff]
    %v1693 = vld [vmem:[#allocation11 + $0x18] sm:$0xff]
    %v1694 = vld [vmem:[%s5] sm:$0x1]
    %v1696 = vlaneseq
    %v1697 = vshrl.u32 %v1696, 7
    %v1698 = vsub.s32 0, %v1697
    %v1699 = vrot.slane %v1694, %v1698
    %v1702 = vsel %vm98, %v1688, 0
    %v1705 = vsel %vm98, %v1689, 0
    %1707 = vmatprep.subr.mxu0 0.0
    %1708 = vmatpush1.msra.mxu0 %v1690
    %1709 = vmatprep.subr.mxu0 0.0
    %1710 = vmatpush1.msra.mxu0 %v1691
    %1711 = vmatprep.subr.mxu0 0.0
    %1712 = vmatpush1.msra.mxu0 %v1692
    %1713 = vmatprep.subr.mxu0 0.0
    %1714 = vmatpush1.msra.mxu0 %v1693
    %1715 = vmatprep.subr.mxu0 0.0
    %1716 = vmatpush1.msra.mxu0 0.0
    %1717 = vmatprep.subr.mxu0 0.0
    %1718 = vmatpush1.msra.mxu0 0.0
    %1719 = vmatprep.subr.mxu0 0.0
    %1720 = vmatpush1.msra.mxu0 0.0
    %1721 = vmatprep.subr.mxu0 0.0
    %1722 = vmatpush1.msra.mxu0 0.0
    %1723 = vmatprep.subr.mxu0 0.0
    %1724 = vmatpush1.msra.mxu0 0.0
    %1725 = vmatprep.subr.mxu0 0.0
    %1726 = vmatpush1.msra.mxu0 0.0
    %1727 = vmatprep.subr.mxu0 0.0
    %1728 = vmatpush1.msra.mxu0 0.0
    %1729 = vmatprep.subr.mxu0 0.0
    %1730 = vmatpush1.msra.mxu0 0.0
    %1731 = vmatprep.subr.mxu0 0.0
    %1732 = vmatpush1.msra.mxu0 0.0
    %1733 = vmatprep.subr.mxu0 0.0
    %1734 = vmatpush1.msra.mxu0 0.0
    %1735 = vmatprep.subr.mxu0 0.0
    %1736 = vmatpush1.msra.mxu0 0.0
    %1737 = vmatprep.subr.mxu0 0.0
    %1738 = vmatpush1.msra.mxu0 0.0
    %1739 = vmatprep.subr.mxu0 0.0
    %1740 = vmatpush1.msra.mxu0 0.0
    %1741 = vmatprep.subr.mxu0 0.0
    %1742 = vmatpush1.msra.mxu0 0.0
    %1743 = vmatprep.subr.mxu0 0.0
    %1744 = vmatpush1.msra.mxu0 0.0
    %1745 = vmatprep.subr.mxu0 0.0
    %1746 = vmatpush1.msra.mxu0 0.0
    %1747 = vmatprep.subr.mxu0 0.0
    %1748 = vmatpush1.msra.mxu0 0.0
    %1749 = vmatprep.subr.mxu0 0.0
    %1750 = vmatpush1.msra.mxu0 0.0
    %1751 = vmatprep.subr.mxu0 0.0
    %1752 = vmatpush1.msra.mxu0 0.0
    %1753 = vmatprep.subr.mxu0 0.0
    %1754 = vmatpush1.msra.mxu0 0.0
    %1755 = vmatprep.subr.mxu0 0.0
    %1756 = vmatpush1.msra.mxu0 0.0
    %1757 = vmatprep.subr.mxu0 0.0
    %1758 = vmatpush1.msra.mxu0 0.0
    %1759 = vmatprep.subr.mxu0 0.0
    %1760 = vmatpush1.msra.mxu0 0.0
    %1761 = vmatprep.subr.mxu0 0.0
    %1762 = vmatpush1.msra.mxu0 0.0
    %1763 = vmatprep.subr.mxu0 0.0
    %1764 = vmatpush1.msra.mxu0 0.0
    %1765 = vmatprep.subr.mxu0 0.0
    %1766 = vmatpush1.msra.mxu0 0.0
    %1767 = vmatprep.subr.mxu0 0.0
    %1768 = vmatpush1.msra.mxu0 0.0
    %1769 = vmatprep.subr.mxu0 0.0
    %1770 = vmatpush1.msra.mxu0 0.0
    %1771 = vmatprep.mubr.f32.mxu0 0.0
    %1772 = vmatmul.mubr.f32.gmra.mrb[0].mxu0 %v1702
    %v1773 = vpop.f32.mrb[0].mxu0
    %v1774 = vadd.f32 %v1699, %v1773
    %v1775 = vpop.f32.mrb[0].mxu0
    %1776 = vmatprep.mubr.f32.mxu0 0.0
    %1777 = vmatmul.mubr.f32.gmra.mrb[0].mxu0 %v1705
    %v1778 = vpop.f32.mrb[0].mxu0
    %v1779 = vadd.f32 %v1699, %v1778
    %v1780 = vpop.f32.mrb[0].mxu0
    %1781 = vdwg.mxu0
    %1782 = vst.msk [vmem:[#allocation12] sm:$0xff] %vm98, %v1774
    %1783 = vst.msk [vmem:[#allocation12 + $0x8] sm:$0xff] %vm98, %v1779
    // Predicated region
    $region46: #{tpu_custom_call.1} parent=1 // pred_check
      _
    $region47: #{tpu_custom_call.1} parent=1 // pred_check_branch
      %1785 = sbr.rel (0) target = $region49
    $region48: #{tpu_custom_call.1} parent=1 // pred_region
      %s1787 = ssub.s32 256, 256
      %1788 = vsyncadd [#allocation5], %s1787
      %s1789 = sshll.u32 [#allocation12], 4
      %s1790 = int_to_ptr.vmem [resolvable:$true] %s1789
      %1795 = dma.vmem_to_hbm [thread:$0]  %s1790, 256, %s6, [#allocation5], 128, 128, 8
    $region49: #{tpu_custom_call.1} parent=1 // pred_fallthru
      _
    // Predicated region
    $region50: #{tpu_custom_call.1} parent=1 // pred_check
      _
    $region51: #{tpu_custom_call.1} parent=1 // pred_check_branch
      %1797 = sbr.rel (0) target = $region53
    $region52: #{tpu_custom_call.1} parent=1 // pred_region
      %1798 = dma.done [#allocation5], 256
    $region53: #{tpu_custom_call.1} parent=1 // pred_fallthru
      _
    %1799 = vsyncpa [#allocation4], 1
    %1800 = vsyncpa [#allocation7], 1
    %1801 = vsyncpa [#allocation10], 1
    %1802 = vsyncpa [#allocation5], 1

</llo_original>
